<compile_context>
chip_gen: v7x
topology: tpu7x:2x2x1
jax: 0.10.0
libtpu: 0.0.40
codegen_flags: <defaults>
</compile_context>

<pallas_src>
import functools

import jax
import jax.numpy as jnp
from jax import lax
from jax.experimental import pallas as pl
from jax.experimental.pallas import tpu as pltpu


def _graph_conv_fused_kernel(
    x_ref,     # (Np, Fp)   f32   Y0 (= initial Y)
    a_ref,     # (Np, 2Np)  bf16  [A_beta | A_gamma]  (HBM / pl.ANY; DMA'd manually)
    w_ref,     # (Fp, 4Fp)  f32   [S1 | S2' | G1 | G2]
    db0_ref,   # (Np, 1)    f32   lam0 * diag(D_beta)
    dg1_ref,   # (Np, 1)    f32   lam1 * diag(D_gamma)
    qa_ref,    # (Np, 1)    f32   alpha / diag(Q_tild)
    out_ref,   # (Np, Fp)   f32   Y
    a_vmem,    # scratch:   (Np, 2Np) bf16  VMEM copy of A
    dma_sem,   # scratch:   DMA semaphore (1,)
    *,
    num_steps,
    one_minus_alpha,
):
    n, f = x_ref.shape
    f32 = jnp.float32

    # Kick off the one-time HBM -> VMEM copy of the stacked adjacency. It is not needed
    # until after step 0's Y @ W dot, so the DMA overlaps that dot.
    a_copy = pltpu.make_async_copy(a_ref, a_vmem, dma_sem.at[0])
    a_copy.start()

    y0 = x_ref[...]
    w = w_ref[...]
    # Hoist the (Np,1) -> (Np,Fp) lane broadcasts out of the (possibly unrolled) step loop
    # (JAX does not CSE broadcast_in_dim).
    db0b = jnp.broadcast_to(db0_ref[...], (n, f))
    dg1b = jnp.broadcast_to(dg1_ref[...], (n, f))
    qab = jnp.broadcast_to(qa_ref[...], (n, f))

    def phase1(y):
        # One (Np,Fp)@(Fp,4Fp) dot covers Y@S1, Y@S2', Y@G1, Y@G2.
        yw = jnp.dot(y, w, preferred_element_type=f32)                     # (Np, 4Fp)
        # Vertically stacked [Y@S1 ; Y@S2'] is the bf16 RHS of the adjacency dot.
        ys = jnp.concatenate([yw[:, :f], yw[:, f:2 * f]], axis=0)          # (2Np, Fp)
        return yw, ys.astype(jnp.bfloat16)

    def phase2(y, yw, ys, a_val):
        # One (Np,2Np)@(2Np,Fp) bf16 MXU dot = A_beta@(Y@S1) + A_gamma@(Y@S2').
        a_ys = jnp.dot(a_val, ys, preferred_element_type=f32)              # (Np, Fp)
        y_hat = (
            a_ys
            - db0b * yw[:, 2 * f:3 * f]     # lam0 * D_beta  * (Y @ H1 H1^T)
            - dg1b * yw[:, 3 * f:]          # lam1 * D_gamma * (Y @ H2 H2^T)
            + y0                            # Y0
            + dg1b * y                      # lam1 * D_gamma * Y   (from L_gamma @ Y)
        )
        return one_minus_alpha * y + qab * y_hat

    # ---- step 0 (peeled so the A DMA wait lands between the two dots) ----
    yw, ys = phase1(y0)
    a_copy.wait()
    a_val = a_vmem[...]
    y = phase2(y0, yw, ys, a_val)

    # ---- remaining steps: serially dependent through Y, unroll only when short ----
    def body(_, y_in):
        yw_i, ys_i = phase1(y_in)
        return phase2(y_in, yw_i, ys_i, a_val)

    if num_steps > 1:
        y = lax.fori_loop(1, num_steps, body, y, unroll=(num_steps <= 4))

    out_ref[...] = y.astype(out_ref.dtype)


def _round_up(x, m):
    return ((x + m - 1) // m) * m


def graph_convolution_forward(X, A, D, H, *, lam0, lam1, alpha, num_steps):
    """Mirrors GraphConvolution.forward (H is not None, diagD, not twoHgamma, not HisI)."""
    A_beta, A_gamma = A
    d_beta, d_gamma, i_diag = D          # diagonals, each (N, 1)
    h1, h2, _h3 = H                      # H['beta'], H['gamma1'], H['gamma2'] (h3 unused)

    N, F = X.shape
    f32 = jnp.float32
    num_steps = int(num_steps)
    assert num_steps >= 1

    # ---- step-invariant weights, constant-folded with lam0 / lam1 / alpha (wrapper) ----
    eye = jnp.eye(F, dtype=f32)
    s1 = lam0 * (h1 + h1.T)                      # lam0 * (H1 + H1^T)
    s2 = lam1 * (h2 + h2.T - eye)                # lam1 * (H2 + H2^T - I) (folds -lam1*A_gamma@Y)
    g1 = h1 @ h1.T                               # H1 H1^T (scale lives in db0)
    g2 = h2 @ h2.T                               # H2 H2^T (scale lives in dg1)

    db0 = lam0 * d_beta                          # (N, 1)
    dg1 = lam1 * d_gamma                         # (N, 1)
    qa = alpha / (lam0 * d_beta + lam1 * d_gamma + i_diag)   # alpha * Q_tild^{-1} diag

    # ---- pad to lane/sublane friendly shapes; zero padding stays zero every step ----
    Np = _round_up(max(N, 8), 8)
    Fp = _round_up(max(F, 128), 128)

    def pad2(a, r, c, dtype=f32):
        a = a.astype(f32)
        return jnp.pad(a, ((0, r - a.shape[0]), (0, c - a.shape[1]))).astype(dtype)

    Xp = pad2(X, Np, Fp)
    # Horizontally stacked adjacency in bf16 (half the HBM->VMEM DMA and VMEM footprint,
    # native MXU dtype instead of multi-pass f32 emulation).
    Ap = jnp.concatenate(
        [pad2(A_beta, Np, Np, jnp.bfloat16), pad2(A_gamma, Np, Np, jnp.bfloat16)], axis=1
    )                                                                     # (Np, 2Np) bf16
    Wp = jnp.concatenate(
        [pad2(s1, Fp, Fp), pad2(s2, Fp, Fp), pad2(g1, Fp, Fp), pad2(g2, Fp, Fp)], axis=1
    )                                                                     # (Fp, 4Fp) f32
    db0p = pad2(db0, Np, 1)
    dg1p = pad2(dg1, Np, 1)
    qap = pad2(qa, Np, 1)        # zero in padded rows -> padded rows of Y stay exactly 0

    # ---- chip-aware VMEM budget (gridless call: everything single-buffered) ----
    bytes_a = Np * (2 * Np) * 2                       # bf16 adjacency (VMEM scratch copy)
    bytes_x = Np * Fp * 4
    bytes_w = Fp * (4 * Fp) * 4
    bytes_cols = 3 * Np * 128 * 4                     # (Np,1) inputs are lane-padded to 128
    bytes_out = Np * Fp * 4
    # per-step intermediates: yw (Np,4Fp) f32, ys (2Np,Fp) bf16, a_ys/y_hat/y and the
    # three hoisted broadcasts (~6 x Np*Fp f32)
    bytes_tmp = Np * (4 * Fp) * 4 + 2 * Np * Fp * 2 + 6 * Np * Fp * 4
    needed = bytes_a + bytes_x + bytes_w + bytes_cols + bytes_out + bytes_tmp

    try:
        vmem_cap = int(pltpu.get_tpu_info().vmem_capacity_bytes)
    except Exception:
        vmem_cap = 64 * 1024 * 1024                   # conservative (v7x per-TC)
    vmem_budget = (vmem_cap * 3) // 4                 # ~48 MiB on v7x, ~96 MiB on v5e/v6e
    assert needed <= vmem_budget, (
        "graph too large for the single-shot VMEM-resident kernel; "
        "see TODO(synk) on the row-tiled variant"
    )
    vmem_limit = int(min(max(needed + (8 << 20), 32 << 20), (vmem_cap * 85) // 100))

    flops = num_steps * (4 * Np * Np * Fp + 8 * Np * Fp * Fp)
    bytes_accessed = int(bytes_a + bytes_x + bytes_w + 3 * Np * 4 + bytes_out)
    cost = pl.CostEstimate(flops=flops, transcendentals=0, bytes_accessed=bytes_accessed)

    kernel = functools.partial(
        _graph_conv_fused_kernel,
        num_steps=num_steps,
        one_minus_alpha=float(1.0 - alpha),
    )

    vmem_spec = pl.BlockSpec(memory_space=pltpu.MemorySpace.VMEM)
    hbm_spec = pl.BlockSpec(memory_space=pl.ANY)      # A stays in HBM; DMA'd in-kernel

    out_padded = pl.pallas_call(
        kernel,
        out_shape=jax.ShapeDtypeStruct((Np, Fp), f32),
        in_specs=[vmem_spec, hbm_spec, vmem_spec, vmem_spec, vmem_spec, vmem_spec],
        out_specs=vmem_spec,
        scratch_shapes=[
            pltpu.VMEM((Np, 2 * Np), jnp.bfloat16),
            pltpu.SemaphoreType.DMA((1,)),
        ],
        compiler_params=pltpu.CompilerParams(vmem_limit_bytes=vmem_limit),
        cost_estimate=cost,
    )(Xp, Ap, Wp, db0p, dg1p, qap)

    return out_padded[:N, :F]


def _reference_forward(X, A, D, H, *, lam0, lam1, alpha, num_steps):
    """Pure-JAX f32 reference (term-for-term as in the PyTorch module)."""
    A_beta, A_gamma = A
    d_beta, d_gamma, i_diag = D
    h1, h2, _ = H
    q_inv = 1.0 / (lam0 * d_beta + lam1 * d_gamma + i_diag)
    Y0 = X
    Y = X
    for _ in range(num_steps):
        ab_y = A_beta @ Y
        ag_y = A_gamma @ Y
        term_beta = ab_y @ (h1 + h1.T) - d_beta * (Y @ (h1 @ h1.T))
        l_gamma_y = d_gamma * Y - ag_y
        term_gamma = l_gamma_y + ag_y @ (h2 + h2.T) - d_gamma * (Y @ (h2 @ h2.T))
        y_hat = lam0 * term_beta + Y0 + lam1 * term_gamma
        Y = (1.0 - alpha) * Y + alpha * (q_inv * y_hat)
    return Y


if __name__ == "__main__":
    key = jax.random.PRNGKey(0)
    N = 128         # number of nodes (incidence dimension)
    F = 64          # in_features == out_features (padded to 128 lanes inside the wrapper)
    num_steps = 3   # args.prop_step
    lam0 = 1.0      # args.lam0
    lam1 = 0.5      # args.lam1
    lam4 = 0.0      # must be 0 in the module
    alp = 0.0       # args.alp == 0 -> derived alpha
    alpha = 1.0 / (1.0 + lam4 + lam0 + lam1)

    kx, kab, kag, kh1, kh2, kh3 = jax.random.split(key, 6)

    X = jax.random.normal(kx, (N, F), dtype=jnp.float32)

    # Symmetric non-negative adjacencies; degree diagonals from row sums.
    A_beta = jax.random.uniform(kab, (N, N), dtype=jnp.float32)
    A_beta = 0.5 * (A_beta + A_beta.T)
    A_gamma = jax.random.uniform(kag, (N, N), dtype=jnp.float32)
    A_gamma = 0.5 * (A_gamma + A_gamma.T)

    d_beta = jnp.sum(A_beta, axis=1, keepdims=True)    # diag(D_beta) as (N, 1)
    d_gamma = jnp.sum(A_gamma, axis=1, keepdims=True)  # diag(D_gamma) as (N, 1)
    i_diag = jnp.ones((N, 1), dtype=jnp.float32)       # diag(I)

    # H params: N(0, 1/in_features) + I  (notresidual = False branch)
    bound = 1.0 / F
    eye = jnp.eye(F, dtype=jnp.float32)
    H1 = bound * jax.random.normal(kh1, (F, F), dtype=jnp.float32) + eye
    H2 = bound * jax.random.normal(kh2, (F, F), dtype=jnp.float32) + eye
    H3 = bound * jax.random.normal(kh3, (F, F), dtype=jnp.float32) + eye  # unused (twoHgamma=False)

    A = (A_beta, A_gamma)
    D = (d_beta, d_gamma, i_diag)
    H = (H1, H2, H3)

    out = graph_convolution_forward(
        X, A, D, H, lam0=lam0, lam1=lam1, alpha=alpha, num_steps=num_steps
    )
    out = jax.block_until_ready(out)

    ref = _reference_forward(
        X, A, D, H, lam0=lam0, lam1=lam1, alpha=alpha, num_steps=num_steps
    )
    assert out.shape == (N, F) and out.dtype == jnp.float32
    # bf16 on the adjacency products (requested optimization) bounds accuracy vs. the f32
    # reference to ~1e-3 per-element for this config; validate at 1e-2 with margin.
    max_err = float(jnp.max(jnp.abs(out - ref)))
    assert jnp.allclose(out, ref, atol=1e-2, rtol=1e-2), (
        f"mismatch vs JAX reference (max abs err {max_err})"
    )

    print("KERNEL_OK")
</pallas_src>

<mosaic_0001>
module attributes {stable_mosaic.version = 11 : i64} {
  func.func @_graph_conv_fused_kernel(%arg0: memref<128x128xf32, #tpu.memory_space<vmem>>, %arg1: memref<128x256xbf16, #tpu.memory_space<any>>, %arg2: memref<128x512xf32, #tpu.memory_space<vmem>>, %arg3: memref<128x1xf32, #tpu.memory_space<vmem>>, %arg4: memref<128x1xf32, #tpu.memory_space<vmem>>, %arg5: memref<128x1xf32, #tpu.memory_space<vmem>>, %arg6: memref<128x128xf32, #tpu.memory_space<vmem>>, %arg7: memref<128x256xbf16, #tpu.memory_space<vmem>>, %arg8: memref<1x!tpu.dma_semaphore, #tpu.memory_space<semaphore_mem>>) attributes {dimension_semantics = [], scalar_prefetch = 0 : i64, scratch_operands = 2 : i64, tpu.core_type = #tpu.core_type<tc>} {
    %c0_i32 = arith.constant 0 : i32
    %0 = tpu.memref_slice %arg8[%c0_i32] : memref<1x!tpu.dma_semaphore, #tpu.memory_space<semaphore_mem>> -> memref<1x!tpu.dma_semaphore, #tpu.memory_space<semaphore_mem>>
    %1 = tpu.memref_squeeze %0 : memref<1x!tpu.dma_semaphore, #tpu.memory_space<semaphore_mem>> -> memref<!tpu.dma_semaphore, #tpu.memory_space<semaphore_mem>>
    tpu.enqueue_dma source(%arg1 : memref<128x256xbf16, #tpu.memory_space<any>>) target(%arg7 : memref<128x256xbf16, #tpu.memory_space<vmem>>) target_semaphore(%1 : memref<!tpu.dma_semaphore, #tpu.memory_space<semaphore_mem>>)
    %c0 = arith.constant 0 : index
    %c0_0 = arith.constant 0 : index
    %2 = vector.load %arg0[%c0, %c0_0] : memref<128x128xf32, #tpu.memory_space<vmem>>, vector<128x128xf32>
    %c0_1 = arith.constant 0 : index
    %c0_2 = arith.constant 0 : index
    %3 = vector.load %arg2[%c0_1, %c0_2] : memref<128x512xf32, #tpu.memory_space<vmem>>, vector<128x512xf32>
    %c0_3 = arith.constant 0 : index
    %c0_4 = arith.constant 0 : index
    %4 = vector.load %arg3[%c0_3, %c0_4] : memref<128x1xf32, #tpu.memory_space<vmem>>, vector<128x1xf32>
    %5 = vector.shape_cast %4 : vector<128x1xf32> to vector<128x1xf32>
    %6 = vector.broadcast %5 : vector<128x1xf32> to vector<128x128xf32>
    %c0_5 = arith.constant 0 : index
    %c0_6 = arith.constant 0 : index
    %7 = vector.load %arg4[%c0_5, %c0_6] : memref<128x1xf32, #tpu.memory_space<vmem>>, vector<128x1xf32>
    %8 = vector.shape_cast %7 : vector<128x1xf32> to vector<128x1xf32>
    %9 = vector.broadcast %8 : vector<128x1xf32> to vector<128x128xf32>
    %c0_7 = arith.constant 0 : index
    %c0_8 = arith.constant 0 : index
    %10 = vector.load %arg5[%c0_7, %c0_8] : memref<128x1xf32, #tpu.memory_space<vmem>>, vector<128x1xf32>
    %11 = vector.shape_cast %10 : vector<128x1xf32> to vector<128x1xf32>
    %12 = vector.broadcast %11 : vector<128x1xf32> to vector<128x128xf32>
    %cst = arith.constant dense<0.000000e+00> : vector<128x512xf32>
    %13 = tpu.matmul %2, %3, %cst {dimension_numbers = #tpu.dot_dimension_numbers<[1], [0], [0], [1], [0, 0, 1, 1], [], []>} : vector<128x128xf32>, vector<128x512xf32>, vector<128x512xf32> -> vector<128x512xf32>
    %14 = vector.extract_strided_slice %13 {offsets = [0, 0], sizes = [128, 128], strides = [1, 1]} : vector<128x512xf32> to vector<128x128xf32>
    %15 = vector.extract_strided_slice %13 {offsets = [0, 128], sizes = [128, 128], strides = [1, 1]} : vector<128x512xf32> to vector<128x128xf32>
    %16 = tpu.concatenate %14, %15 in 0 : vector<128x128xf32>, vector<128x128xf32> -> vector<256x128xf32>
    %17 = arith.truncf %16 : vector<256x128xf32> to vector<256x128xbf16>
    %c0_i32_9 = arith.constant 0 : i32
    %18 = tpu.memref_slice %arg8[%c0_i32_9] : memref<1x!tpu.dma_semaphore, #tpu.memory_space<semaphore_mem>> -> memref<1x!tpu.dma_semaphore, #tpu.memory_space<semaphore_mem>>
    %19 = tpu.memref_squeeze %18 : memref<1x!tpu.dma_semaphore, #tpu.memory_space<semaphore_mem>> -> memref<!tpu.dma_semaphore, #tpu.memory_space<semaphore_mem>>
    tpu.wait_dma2 semaphore(%19 : memref<!tpu.dma_semaphore, #tpu.memory_space<semaphore_mem>>) src(%arg1 : memref<128x256xbf16, #tpu.memory_space<any>>) dst(%arg7 : memref<128x256xbf16, #tpu.memory_space<vmem>>)
    %c0_10 = arith.constant 0 : index
    %c0_11 = arith.constant 0 : index
    %20 = vector.load %arg7[%c0_10, %c0_11] : memref<128x256xbf16, #tpu.memory_space<vmem>>, vector<128x256xbf16>
    %cst_12 = arith.constant dense<0.000000e+00> : vector<128x128xf32>
    %21 = tpu.matmul %20, %17, %cst_12 {dimension_numbers = #tpu.dot_dimension_numbers<[1], [0], [0], [1], [0, 0, 1, 1], [], []>} : vector<128x256xbf16>, vector<256x128xbf16>, vector<128x128xf32> -> vector<128x128xf32>
    %22 = vector.extract_strided_slice %13 {offsets = [0, 256], sizes = [128, 128], strides = [1, 1]} : vector<128x512xf32> to vector<128x128xf32>
    %23 = arith.mulf %6, %22 : vector<128x128xf32>
    %24 = arith.subf %21, %23 : vector<128x128xf32>
    %25 = vector.extract_strided_slice %13 {offsets = [0, 384], sizes = [128, 128], strides = [1, 1]} : vector<128x512xf32> to vector<128x128xf32>
    %26 = arith.mulf %9, %25 : vector<128x128xf32>
    %27 = arith.subf %24, %26 : vector<128x128xf32>
    %28 = arith.addf %27, %2 : vector<128x128xf32>
    %29 = arith.mulf %9, %2 : vector<128x128xf32>
    %30 = arith.addf %28, %29 : vector<128x128xf32>
    %cst_13 = arith.constant 6.000000e-01 : f32
    %31 = vector.broadcast %cst_13 : f32 to vector<128x128xf32>
    %32 = arith.mulf %31, %2 : vector<128x128xf32>
    %33 = arith.mulf %12, %30 : vector<128x128xf32>
    %34 = arith.addf %32, %33 : vector<128x128xf32>
    %c0_i32_14 = arith.constant 0 : i32
    %cst_15 = arith.constant dense<0.000000e+00> : vector<128x512xf32>
    %35 = tpu.matmul %34, %3, %cst_15 {dimension_numbers = #tpu.dot_dimension_numbers<[1], [0], [0], [1], [0, 0, 1, 1], [], []>} : vector<128x128xf32>, vector<128x512xf32>, vector<128x512xf32> -> vector<128x512xf32>
    %36 = vector.extract_strided_slice %35 {offsets = [0, 0], sizes = [128, 128], strides = [1, 1]} : vector<128x512xf32> to vector<128x128xf32>
    %37 = vector.extract_strided_slice %35 {offsets = [0, 128], sizes = [128, 128], strides = [1, 1]} : vector<128x512xf32> to vector<128x128xf32>
    %38 = tpu.concatenate %36, %37 in 0 : vector<128x128xf32>, vector<128x128xf32> -> vector<256x128xf32>
    %39 = arith.truncf %38 : vector<256x128xf32> to vector<256x128xbf16>
    %cst_16 = arith.constant dense<0.000000e+00> : vector<128x128xf32>
    %40 = tpu.matmul %20, %39, %cst_16 {dimension_numbers = #tpu.dot_dimension_numbers<[1], [0], [0], [1], [0, 0, 1, 1], [], []>} : vector<128x256xbf16>, vector<256x128xbf16>, vector<128x128xf32> -> vector<128x128xf32>
    %41 = vector.extract_strided_slice %35 {offsets = [0, 256], sizes = [128, 128], strides = [1, 1]} : vector<128x512xf32> to vector<128x128xf32>
    %42 = arith.mulf %6, %41 : vector<128x128xf32>
    %43 = arith.subf %40, %42 : vector<128x128xf32>
    %44 = vector.extract_strided_slice %35 {offsets = [0, 384], sizes = [128, 128], strides = [1, 1]} : vector<128x512xf32> to vector<128x128xf32>
    %45 = arith.mulf %9, %44 : vector<128x128xf32>
    %46 = arith.subf %43, %45 : vector<128x128xf32>
    %47 = arith.addf %46, %2 : vector<128x128xf32>
    %48 = arith.mulf %9, %34 : vector<128x128xf32>
    %49 = arith.addf %47, %48 : vector<128x128xf32>
    %cst_17 = arith.constant 6.000000e-01 : f32
    %50 = vector.broadcast %cst_17 : f32 to vector<128x128xf32>
    %51 = arith.mulf %50, %34 : vector<128x128xf32>
    %52 = arith.mulf %12, %49 : vector<128x128xf32>
    %53 = arith.addf %51, %52 : vector<128x128xf32>
    %c1_i32 = arith.constant 1 : i32
    %cst_18 = arith.constant dense<0.000000e+00> : vector<128x512xf32>
    %54 = tpu.matmul %53, %3, %cst_18 {dimension_numbers = #tpu.dot_dimension_numbers<[1], [0], [0], [1], [0, 0, 1, 1], [], []>} : vector<128x128xf32>, vector<128x512xf32>, vector<128x512xf32> -> vector<128x512xf32>
    %55 = vector.extract_strided_slice %54 {offsets = [0, 0], sizes = [128, 128], strides = [1, 1]} : vector<128x512xf32> to vector<128x128xf32>
    %56 = vector.extract_strided_slice %54 {offsets = [0, 128], sizes = [128, 128], strides = [1, 1]} : vector<128x512xf32> to vector<128x128xf32>
    %57 = tpu.concatenate %55, %56 in 0 : vector<128x128xf32>, vector<128x128xf32> -> vector<256x128xf32>
    %58 = arith.truncf %57 : vector<256x128xf32> to vector<256x128xbf16>
    %cst_19 = arith.constant dense<0.000000e+00> : vector<128x128xf32>
    %59 = tpu.matmul %20, %58, %cst_19 {dimension_numbers = #tpu.dot_dimension_numbers<[1], [0], [0], [1], [0, 0, 1, 1], [], []>} : vector<128x256xbf16>, vector<256x128xbf16>, vector<128x128xf32> -> vector<128x128xf32>
    %60 = vector.extract_strided_slice %54 {offsets = [0, 256], sizes = [128, 128], strides = [1, 1]} : vector<128x512xf32> to vector<128x128xf32>
    %61 = arith.mulf %6, %60 : vector<128x128xf32>
    %62 = arith.subf %59, %61 : vector<128x128xf32>
    %63 = vector.extract_strided_slice %54 {offsets = [0, 384], sizes = [128, 128], strides = [1, 1]} : vector<128x512xf32> to vector<128x128xf32>
    %64 = arith.mulf %9, %63 : vector<128x128xf32>
    %65 = arith.subf %62, %64 : vector<128x128xf32>
    %66 = arith.addf %65, %2 : vector<128x128xf32>
    %67 = arith.mulf %9, %53 : vector<128x128xf32>
    %68 = arith.addf %66, %67 : vector<128x128xf32>
    %cst_20 = arith.constant 6.000000e-01 : f32
    %69 = vector.broadcast %cst_20 : f32 to vector<128x128xf32>
    %70 = arith.mulf %69, %53 : vector<128x128xf32>
    %71 = arith.mulf %12, %68 : vector<128x128xf32>
    %72 = arith.addf %70, %71 : vector<128x128xf32>
    %c0_21 = arith.constant 0 : index
    %c0_22 = arith.constant 0 : index
    %73 = vector.load %arg6[%c0_21, %c0_22] : memref<128x128xf32, #tpu.memory_space<vmem>>, vector<128x128xf32>
    tpu.vector_store %arg6[%c0_21, %c0_22], %72 {strides = array<i32>} : memref<128x128xf32, #tpu.memory_space<vmem>>, vector<128x128xf32>,
    return
  }
}

</mosaic_0001>

<llo_original>
// kernel: tpu_custom_call.1
$region0: #{tpu_custom_call.1}
  #allocation0 [shape = 'u32[]', space=smem, size = 0x4, offset = 0x4, fixed_abs, tag = 'smem constant byte address 0x4 - core index']
  #allocation1 [shape = 'u32[144,128]{1,0:T(1,128)}', space=vmem, size = 0x12000, scoped, tag = 'internal scratch']
  #allocation2 [shape = 'bf16[128,256]{1,0:T(16,128)(2,1)}', space=vmem, size = 0x10000, scoped, tag = 'scratch operand']
  #allocation3 [shape = 's32[1]{0}', space=sflag, size = 0x4, scoped, tag = 'scratch operand']
  #allocation8 [shape = 's32[]', space=sflag, size = 0x4, offset = 0, fixed_abs, tag = 'sflag constant byte address 0x0 - dummy sync flag']
  %s0 = inlined_call_operand.vmem [shape: f32[128,128], index: 0, kind: input, shape index: {}]
  %s1 = inlined_call_operand.vmem [shape: bf16[128,256], index: 1, kind: input, shape index: {}]
  %s2 = inlined_call_operand.hbm [shape: f32[128,512], index: 2, kind: input, shape index: {}]
  %s3 = inlined_call_operand.vmem [shape: f32[128,1], index: 3, kind: input, shape index: {}]
  %s4 = inlined_call_operand.vmem [shape: f32[128,1], index: 4, kind: input, shape index: {}]
  %s5 = inlined_call_operand.vmem [shape: f32[128,1], index: 5, kind: input, shape index: {}]
  %s6 = inlined_call_operand.hbm [shape: f32[128,128], index: 6, kind: output, shape index: {}]
  %s7 = sld [smem:[#allocation0]]
  $region71: #{tpu_custom_call.1} parent=0
    _
  %s9 = ssub.s32 1, %s7
  %s10 = scalar_select 0, %s9, %s7
  $region1: #{tpu_custom_call.1} parent=0
    #allocation4 [shape = 'u8[262144]{0}', space=vmem, size = 0x40000, scoped, tag = 'input window, operand 2, single buffered']
    #allocation5 [shape = 's32[1]{0}', space=sflag, size = 0x4, scoped, tag = 'scoped memory for tpu_custom_call.1']
    #allocation6 [shape = 's32[1]{0}', space=sflag, size = 0x4, scoped, tag = 'scoped memory for tpu_custom_call.1']
    #allocation7 [shape = 'u8[65536]{0}', space=vmem, size = 0x10000, scoped, tag = 'output window, operand 0, single buffered']
    %11 = vsyncpa [#allocation5], 0
    %12 = vsyncpa [#allocation6], 0
    // Predicated region
    $region2: #{tpu_custom_call.1} parent=1 // pred_check
      _
    $region3: #{tpu_custom_call.1} parent=1 // pred_check_branch
      %14 = sbr.rel (0) target = $region5
    $region4: #{tpu_custom_call.1} parent=1 // pred_region
      _
    $region5: #{tpu_custom_call.1} parent=1 // pred_fallthru
      _
    // Predicated region
    $region6: #{tpu_custom_call.1} parent=1 // pred_check
      _
    $region7: #{tpu_custom_call.1} parent=1 // pred_check_branch
      %16 = sbr.rel (0) target = $region9
    $region8: #{tpu_custom_call.1} parent=1 // pred_region
      %s18 = ssub.s32 8192, 8192
      %19 = vsyncadd [#allocation5], %s18
      %s20 = sshll.u32 [#allocation4], 4
      %s21 = int_to_ptr.vmem [resolvable:$true] %s20
      %26 = dma.hbm_to_vmem [thread:$0]  %s2, 8192, %s21, [#allocation5], 512, 512, 32
    $region9: #{tpu_custom_call.1} parent=1 // pred_fallthru
      _
    // Predicated region
    $region10: #{tpu_custom_call.1} parent=1 // pred_check
      _
    $region11: #{tpu_custom_call.1} parent=1 // pred_check_branch
      %28 = sbr.rel (0) target = $region13
    $region12: #{tpu_custom_call.1} parent=1 // pred_region
      _
    $region13: #{tpu_custom_call.1} parent=1 // pred_fallthru
      _
    // Predicated region
    $region14: #{tpu_custom_call.1} parent=1 // pred_check
      _
    $region15: #{tpu_custom_call.1} parent=1 // pred_check_branch
      %30 = sbr.rel (0) target = $region17
    $region16: #{tpu_custom_call.1} parent=1 // pred_region
      _
    $region17: #{tpu_custom_call.1} parent=1 // pred_fallthru
      _
    // Predicated region
    $region18: #{tpu_custom_call.1} parent=1 // pred_check
      _
    $region19: #{tpu_custom_call.1} parent=1 // pred_check_branch
      %32 = sbr.rel (0) target = $region21
    $region20: #{tpu_custom_call.1} parent=1 // pred_region
      _
    $region21: #{tpu_custom_call.1} parent=1 // pred_fallthru
      _
    // Predicated region
    $region22: #{tpu_custom_call.1} parent=1 // pred_check
      _
    $region23: #{tpu_custom_call.1} parent=1 // pred_check_branch
      %34 = sbr.rel (0) target = $region25
    $region24: #{tpu_custom_call.1} parent=1 // pred_region
      %35 = dma.done [#allocation5], 8192
    $region25: #{tpu_custom_call.1} parent=1 // pred_fallthru
      _
    %p38 = scmp.lt.u32.totalorder 4, 8
    %p39 = pneg %p38
    // Predicated region
    $region26: #{tpu_custom_call.1} parent=1 // pred_check
      _
    $region27: #{tpu_custom_call.1} parent=1 // pred_check_branch
      %41 = sbr.rel (%p38) target = $region29
    $region28: #{tpu_custom_call.1} parent=1 // pred_region
      %s118 = sand.u32 4, 7
      %p119 = scmp.eq.s32.totalorder %s118, 0
      %p120 = pneg %p119
      // Predicated region
      $region41: #{tpu_custom_call.1} parent=28 // pred_check
        _
      $region42: #{tpu_custom_call.1} parent=28 // pred_check_branch
        %122 = sbr.rel (%p119) target = $region44
      $region43: #{tpu_custom_call.1} parent=28 // pred_region
        %s123 = sand.u32 4, 7
        %s124 = ssub.s32 4, %s123
        %s125 = scalar_lea.vmem %s1, %s124
        %s126 = ssub.s32 4, %s123
        %s127 = scalar_lea.vmem [#allocation2], %s126
        loop: start=0, step=1, limit=1
        $region45: #{tpu_custom_call.1} parent=43 // loop_pre_header
          _
        $region46: #{tpu_custom_call.1} parent=43 // loop_header
          %s129 = sphi 0, %s133
          %p130 = scmp.ge.s32.totalorder %s129, 1
          %s134 = sphi %s1, %s1
          %s135 = sphi [#allocation2], [#allocation2]
        $region47: #{tpu_custom_call.1} parent=43 // loop_header_branch
          %132 = sbr.rel (%p130) target = $region51
        $region48: #{tpu_custom_call.1} parent=43 // loop_body
          _
        $region49: #{tpu_custom_call.1} parent=43 // loop_footer
          %s133 = sadd.s32 1, %s129
        $region50: #{tpu_custom_call.1} parent=43 // loop_footer_branch
          %128 = sbr.rel target = $region46
        $region51: #{tpu_custom_call.1} parent=43 // loop_exit
          _
        %s136 = sshllo.u32 0, %s123
        loop: start=0, step=1, limit=1
        $region52: #{tpu_custom_call.1} parent=43 // loop_pre_header
          _
        $region53: #{tpu_custom_call.1} parent=43 // loop_header
          %s138 = sphi 0, %s142
          %p139 = scmp.ge.s32.totalorder %s138, 1
          %s143 = sphi %s125, %s125
          %s144 = sphi %s127, %s127
        $region54: #{tpu_custom_call.1} parent=43 // loop_header_branch
          %141 = sbr.rel (%p139) target = $region58
        $region55: #{tpu_custom_call.1} parent=43 // loop_body
          %v145 = vld [vmem:[%s143] sm:%s136]
          %146 = vst [vmem:[%s144] sm:%s136] %v145
          %v147 = vld [vmem:[%s143 + $0x8] sm:%s136]
          %148 = vst [vmem:[%s144 + $0x4] sm:%s136] %v147
          %v149 = vld [vmem:[%s143 + $0x4] sm:%s136]
          %150 = vst [vmem:[%s144 + $0x8] sm:%s136] %v149
          %v151 = vld [vmem:[%s143 + $0xc] sm:%s136]
          %152 = vst [vmem:[%s144 + $0xc] sm:%s136] %v151
          %v153 = vld [vmem:[%s143 + $0x10] sm:%s136]
          %154 = vst [vmem:[%s144 + $0x10] sm:%s136] %v153
          %v155 = vld [vmem:[%s143 + $0x18] sm:%s136]
          %156 = vst [vmem:[%s144 + $0x14] sm:%s136] %v155
          %v157 = vld [vmem:[%s143 + $0x14] sm:%s136]
          %158 = vst [vmem:[%s144 + $0x18] sm:%s136] %v157
          %v159 = vld [vmem:[%s143 + $0x1c] sm:%s136]
          %160 = vst [vmem:[%s144 + $0x1c] sm:%s136] %v159
          %v161 = vld [vmem:[%s143 + $0x20] sm:%s136]
          %162 = vst [vmem:[%s144 + $0x20] sm:%s136] %v161
          %v163 = vld [vmem:[%s143 + $0x28] sm:%s136]
          %164 = vst [vmem:[%s144 + $0x24] sm:%s136] %v163
          %v165 = vld [vmem:[%s143 + $0x24] sm:%s136]
          %166 = vst [vmem:[%s144 + $0x28] sm:%s136] %v165
          %v167 = vld [vmem:[%s143 + $0x2c] sm:%s136]
          %168 = vst [vmem:[%s144 + $0x2c] sm:%s136] %v167
          %v169 = vld [vmem:[%s143 + $0x30] sm:%s136]
          %170 = vst [vmem:[%s144 + $0x30] sm:%s136] %v169
          %v171 = vld [vmem:[%s143 + $0x38] sm:%s136]
          %172 = vst [vmem:[%s144 + $0x34] sm:%s136] %v171
          %v173 = vld [vmem:[%s143 + $0x34] sm:%s136]
          %174 = vst [vmem:[%s144 + $0x38] sm:%s136] %v173
          %v175 = vld [vmem:[%s143 + $0x3c] sm:%s136]
          %176 = vst [vmem:[%s144 + $0x3c] sm:%s136] %v175
          %v177 = vld [vmem:[%s143 + $0x40] sm:%s136]
          %178 = vst [vmem:[%s144 + $0x40] sm:%s136] %v177
          %v179 = vld [vmem:[%s143 + $0x48] sm:%s136]
          %180 = vst [vmem:[%s144 + $0x44] sm:%s136] %v179
          %v181 = vld [vmem:[%s143 + $0x44] sm:%s136]
          %182 = vst [vmem:[%s144 + $0x48] sm:%s136] %v181
          %v183 = vld [vmem:[%s143 + $0x4c] sm:%s136]
          %184 = vst [vmem:[%s144 + $0x4c] sm:%s136] %v183
          %v185 = vld [vmem:[%s143 + $0x50] sm:%s136]
          %186 = vst [vmem:[%s144 + $0x50] sm:%s136] %v185
          %v187 = vld [vmem:[%s143 + $0x58] sm:%s136]
          %188 = vst [vmem:[%s144 + $0x54] sm:%s136] %v187
          %v189 = vld [vmem:[%s143 + $0x54] sm:%s136]
          %190 = vst [vmem:[%s144 + $0x58] sm:%s136] %v189
          %v191 = vld [vmem:[%s143 + $0x5c] sm:%s136]
          %192 = vst [vmem:[%s144 + $0x5c] sm:%s136] %v191
          %v193 = vld [vmem:[%s143 + $0x60] sm:%s136]
          %194 = vst [vmem:[%s144 + $0x60] sm:%s136] %v193
          %v195 = vld [vmem:[%s143 + $0x68] sm:%s136]
          %196 = vst [vmem:[%s144 + $0x64] sm:%s136] %v195
          %v197 = vld [vmem:[%s143 + $0x64] sm:%s136]
          %198 = vst [vmem:[%s144 + $0x68] sm:%s136] %v197
          %v199 = vld [vmem:[%s143 + $0x6c] sm:%s136]
          %200 = vst [vmem:[%s144 + $0x6c] sm:%s136] %v199
          %v201 = vld [vmem:[%s143 + $0x70] sm:%s136]
          %202 = vst [vmem:[%s144 + $0x70] sm:%s136] %v201
          %v203 = vld [vmem:[%s143 + $0x78] sm:%s136]
          %204 = vst [vmem:[%s144 + $0x74] sm:%s136] %v203
          %v205 = vld [vmem:[%s143 + $0x74] sm:%s136]
          %206 = vst [vmem:[%s144 + $0x78] sm:%s136] %v205
          %v207 = vld [vmem:[%s143 + $0x7c] sm:%s136]
          %208 = vst [vmem:[%s144 + $0x7c] sm:%s136] %v207
        $region56: #{tpu_custom_call.1} parent=43 // loop_footer
          %s142 = sadd.s32 1, %s138
        $region57: #{tpu_custom_call.1} parent=43 // loop_footer_branch
          %137 = sbr.rel target = $region53
        $region58: #{tpu_custom_call.1} parent=43 // loop_exit
          _
      $region44: #{tpu_custom_call.1} parent=28 // pred_fallthru
        _
    $region29: #{tpu_custom_call.1} parent=1 // pred_fallthru
      _
    // Predicated region
    $region30: #{tpu_custom_call.1} parent=1 // pred_check
      %p42 = pneg %p38
    $region31: #{tpu_custom_call.1} parent=1 // pred_check_branch
      %44 = sbr.rel (%p42) target = $region33
    $region32: #{tpu_custom_call.1} parent=1 // pred_region
      %s45 = sshllo.u32 0, 4
      loop: start=0, step=1, limit=1
      $region34: #{tpu_custom_call.1} parent=32 // loop_pre_header
        _
      $region35: #{tpu_custom_call.1} parent=32 // loop_header
        %s47 = sphi 0, %s51
        %p48 = scmp.ge.s32.totalorder %s47, 1
        %s52 = sphi %s1, %s1
        %s53 = sphi [#allocation2], [#allocation2]
      $region36: #{tpu_custom_call.1} parent=32 // loop_header_branch
        %50 = sbr.rel (%p48) target = $region40
      $region37: #{tpu_custom_call.1} parent=32 // loop_body
        %v54 = vld [vmem:[%s52] sm:%s45]
        %55 = vst [vmem:[%s53] sm:%s45] %v54
        %v56 = vld [vmem:[%s52 + $0x8] sm:%s45]
        %57 = vst [vmem:[%s53 + $0x4] sm:%s45] %v56
        %v58 = vld [vmem:[%s52 + $0x4] sm:%s45]
        %59 = vst [vmem:[%s53 + $0x8] sm:%s45] %v58
        %v60 = vld [vmem:[%s52 + $0xc] sm:%s45]
        %61 = vst [vmem:[%s53 + $0xc] sm:%s45] %v60
        %v62 = vld [vmem:[%s52 + $0x10] sm:%s45]
        %63 = vst [vmem:[%s53 + $0x10] sm:%s45] %v62
        %v64 = vld [vmem:[%s52 + $0x18] sm:%s45]
        %65 = vst [vmem:[%s53 + $0x14] sm:%s45] %v64
        %v66 = vld [vmem:[%s52 + $0x14] sm:%s45]
        %67 = vst [vmem:[%s53 + $0x18] sm:%s45] %v66
        %v68 = vld [vmem:[%s52 + $0x1c] sm:%s45]
        %69 = vst [vmem:[%s53 + $0x1c] sm:%s45] %v68
        %v70 = vld [vmem:[%s52 + $0x20] sm:%s45]
        %71 = vst [vmem:[%s53 + $0x20] sm:%s45] %v70
        %v72 = vld [vmem:[%s52 + $0x28] sm:%s45]
        %73 = vst [vmem:[%s53 + $0x24] sm:%s45] %v72
        %v74 = vld [vmem:[%s52 + $0x24] sm:%s45]
        %75 = vst [vmem:[%s53 + $0x28] sm:%s45] %v74
        %v76 = vld [vmem:[%s52 + $0x2c] sm:%s45]
        %77 = vst [vmem:[%s53 + $0x2c] sm:%s45] %v76
        %v78 = vld [vmem:[%s52 + $0x30] sm:%s45]
        %79 = vst [vmem:[%s53 + $0x30] sm:%s45] %v78
        %v80 = vld [vmem:[%s52 + $0x38] sm:%s45]
        %81 = vst [vmem:[%s53 + $0x34] sm:%s45] %v80
        %v82 = vld [vmem:[%s52 + $0x34] sm:%s45]
        %83 = vst [vmem:[%s53 + $0x38] sm:%s45] %v82
        %v84 = vld [vmem:[%s52 + $0x3c] sm:%s45]
        %85 = vst [vmem:[%s53 + $0x3c] sm:%s45] %v84
        %v86 = vld [vmem:[%s52 + $0x40] sm:%s45]
        %87 = vst [vmem:[%s53 + $0x40] sm:%s45] %v86
        %v88 = vld [vmem:[%s52 + $0x48] sm:%s45]
        %89 = vst [vmem:[%s53 + $0x44] sm:%s45] %v88
        %v90 = vld [vmem:[%s52 + $0x44] sm:%s45]
        %91 = vst [vmem:[%s53 + $0x48] sm:%s45] %v90
        %v92 = vld [vmem:[%s52 + $0x4c] sm:%s45]
        %93 = vst [vmem:[%s53 + $0x4c] sm:%s45] %v92
        %v94 = vld [vmem:[%s52 + $0x50] sm:%s45]
        %95 = vst [vmem:[%s53 + $0x50] sm:%s45] %v94
        %v96 = vld [vmem:[%s52 + $0x58] sm:%s45]
        %97 = vst [vmem:[%s53 + $0x54] sm:%s45] %v96
        %v98 = vld [vmem:[%s52 + $0x54] sm:%s45]
        %99 = vst [vmem:[%s53 + $0x58] sm:%s45] %v98
        %v100 = vld [vmem:[%s52 + $0x5c] sm:%s45]
        %101 = vst [vmem:[%s53 + $0x5c] sm:%s45] %v100
        %v102 = vld [vmem:[%s52 + $0x60] sm:%s45]
        %103 = vst [vmem:[%s53 + $0x60] sm:%s45] %v102
        %v104 = vld [vmem:[%s52 + $0x68] sm:%s45]
        %105 = vst [vmem:[%s53 + $0x64] sm:%s45] %v104
        %v106 = vld [vmem:[%s52 + $0x64] sm:%s45]
        %107 = vst [vmem:[%s53 + $0x68] sm:%s45] %v106
        %v108 = vld [vmem:[%s52 + $0x6c] sm:%s45]
        %109 = vst [vmem:[%s53 + $0x6c] sm:%s45] %v108
        %v110 = vld [vmem:[%s52 + $0x70] sm:%s45]
        %111 = vst [vmem:[%s53 + $0x70] sm:%s45] %v110
        %v112 = vld [vmem:[%s52 + $0x78] sm:%s45]
        %113 = vst [vmem:[%s53 + $0x74] sm:%s45] %v112
        %v114 = vld [vmem:[%s52 + $0x74] sm:%s45]
        %115 = vst [vmem:[%s53 + $0x78] sm:%s45] %v114
        %v116 = vld [vmem:[%s52 + $0x7c] sm:%s45]
        %117 = vst [vmem:[%s53 + $0x7c] sm:%s45] %v116
      $region38: #{tpu_custom_call.1} parent=32 // loop_footer
        %s51 = sadd.s32 1, %s47
      $region39: #{tpu_custom_call.1} parent=32 // loop_footer_branch
        %46 = sbr.rel target = $region35
      $region40: #{tpu_custom_call.1} parent=32 // loop_exit
        _
    $region33: #{tpu_custom_call.1} parent=1 // pred_fallthru
      _
    // Predicated region
    $region59: #{tpu_custom_call.1} parent=1 // pred_check
      _
    $region60: #{tpu_custom_call.1} parent=1 // pred_check_branch
      %211 = sbr.rel (0) target = $region62
    $region61: #{tpu_custom_call.1} parent=1 // pred_region
      %212 = vsyncadd [#allocation3], 2048
    $region62: #{tpu_custom_call.1} parent=1 // pred_fallthru
      _
    %v213 = vld [vmem:[%s0] sm:$0xff]
    %v214 = vld [vmem:[%s0 + $0x8] sm:$0xff]
    %v215 = vld [vmem:[%s0 + $0x10] sm:$0xff]
    %v216 = vld [vmem:[%s0 + $0x18] sm:$0xff]
    %v217 = vld [vmem:[%s0 + $0x20] sm:$0xff]
    %v218 = vld [vmem:[%s0 + $0x28] sm:$0xff]
    %v219 = vld [vmem:[%s0 + $0x30] sm:$0xff]
    %v220 = vld [vmem:[%s0 + $0x38] sm:$0xff]
    %v221 = vld [vmem:[%s0 + $0x40] sm:$0xff]
    %v222 = vld [vmem:[%s0 + $0x48] sm:$0xff]
    %v223 = vld [vmem:[%s0 + $0x50] sm:$0xff]
    %v224 = vld [vmem:[%s0 + $0x58] sm:$0xff]
    %v225 = vld [vmem:[%s0 + $0x60] sm:$0xff]
    %v226 = vld [vmem:[%s0 + $0x68] sm:$0xff]
    %v227 = vld [vmem:[%s0 + $0x70] sm:$0xff]
    %v228 = vld [vmem:[%s0 + $0x78] sm:$0xff]
    %v229 = vld [vmem:[#allocation4] sm:$0xff]
    %v230 = vld [vmem:[#allocation4 + $0x8] sm:$0xff]
    %v231 = vld [vmem:[#allocation4 + $0x10] sm:$0xff]
    %v232 = vld [vmem:[#allocation4 + $0x18] sm:$0xff]
    %v233 = vld [vmem:[#allocation4 + $0x20] sm:$0xff]
    %v234 = vld [vmem:[#allocation4 + $0x28] sm:$0xff]
    %v235 = vld [vmem:[#allocation4 + $0x30] sm:$0xff]
    %v236 = vld [vmem:[#allocation4 + $0x38] sm:$0xff]
    %v237 = vld [vmem:[#allocation4 + $0x40] sm:$0xff]
    %v238 = vld [vmem:[#allocation4 + $0x48] sm:$0xff]
    %v239 = vld [vmem:[#allocation4 + $0x50] sm:$0xff]
    %v240 = vld [vmem:[#allocation4 + $0x58] sm:$0xff]
    %v241 = vld [vmem:[#allocation4 + $0x60] sm:$0xff]
    %v242 = vld [vmem:[#allocation4 + $0x68] sm:$0xff]
    %v243 = vld [vmem:[#allocation4 + $0x70] sm:$0xff]
    %v244 = vld [vmem:[#allocation4 + $0x78] sm:$0xff]
    %v245 = vld [vmem:[#allocation4 + $0x80] sm:$0xff]
    %v246 = vld [vmem:[#allocation4 + $0x88] sm:$0xff]
    %v247 = vld [vmem:[#allocation4 + $0x90] sm:$0xff]
    %v248 = vld [vmem:[#allocation4 + $0x98] sm:$0xff]
    %v249 = vld [vmem:[#allocation4 + $0xa0] sm:$0xff]
    %v250 = vld [vmem:[#allocation4 + $0xa8] sm:$0xff]
    %v251 = vld [vmem:[#allocation4 + $0xb0] sm:$0xff]
    %v252 = vld [vmem:[#allocation4 + $0xb8] sm:$0xff]
    %v253 = vld [vmem:[#allocation4 + $0xc0] sm:$0xff]
    %v254 = vld [vmem:[#allocation4 + $0xc8] sm:$0xff]
    %v255 = vld [vmem:[#allocation4 + $0xd0] sm:$0xff]
    %v256 = vld [vmem:[#allocation4 + $0xd8] sm:$0xff]
    %v257 = vld [vmem:[#allocation4 + $0xe0] sm:$0xff]
    %v258 = vld [vmem:[#allocation4 + $0xe8] sm:$0xff]
    %v259 = vld [vmem:[#allocation4 + $0xf0] sm:$0xff]
    %v260 = vld [vmem:[#allocation4 + $0xf8] sm:$0xff]
    %v261 = vld [vmem:[#allocation4 + $0x100] sm:$0xff]
    %v262 = vld [vmem:[#allocation4 + $0x108] sm:$0xff]
    %v263 = vld [vmem:[#allocation4 + $0x110] sm:$0xff]
    %v264 = vld [vmem:[#allocation4 + $0x118] sm:$0xff]
    %v265 = vld [vmem:[#allocation4 + $0x120] sm:$0xff]
    %v266 = vld [vmem:[#allocation4 + $0x128] sm:$0xff]
    %v267 = vld [vmem:[#allocation4 + $0x130] sm:$0xff]
    %v268 = vld [vmem:[#allocation4 + $0x138] sm:$0xff]
    %v269 = vld [vmem:[#allocation4 + $0x140] sm:$0xff]
    %v270 = vld [vmem:[#allocation4 + $0x148] sm:$0xff]
    %v271 = vld [vmem:[#allocation4 + $0x150] sm:$0xff]
    %v272 = vld [vmem:[#allocation4 + $0x158] sm:$0xff]
    %v273 = vld [vmem:[#allocation4 + $0x160] sm:$0xff]
    %v274 = vld [vmem:[#allocation4 + $0x168] sm:$0xff]
    %v275 = vld [vmem:[#allocation4 + $0x170] sm:$0xff]
    %v276 = vld [vmem:[#allocation4 + $0x178] sm:$0xff]
    %v277 = vld [vmem:[#allocation4 + $0x180] sm:$0xff]
    %v278 = vld [vmem:[#allocation4 + $0x188] sm:$0xff]
    %v279 = vld [vmem:[#allocation4 + $0x190] sm:$0xff]
    %v280 = vld [vmem:[#allocation4 + $0x198] sm:$0xff]
    %v281 = vld [vmem:[#allocation4 + $0x1a0] sm:$0xff]
    %v282 = vld [vmem:[#allocation4 + $0x1a8] sm:$0xff]
    %v283 = vld [vmem:[#allocation4 + $0x1b0] sm:$0xff]
    %v284 = vld [vmem:[#allocation4 + $0x1b8] sm:$0xff]
    %v285 = vld [vmem:[#allocation4 + $0x1c0] sm:$0xff]
    %v286 = vld [vmem:[#allocation4 + $0x1c8] sm:$0xff]
    %v287 = vld [vmem:[#allocation4 + $0x1d0] sm:$0xff]
    %v288 = vld [vmem:[#allocation4 + $0x1d8] sm:$0xff]
    %v289 = vld [vmem:[#allocation4 + $0x1e0] sm:$0xff]
    %v290 = vld [vmem:[#allocation4 + $0x1e8] sm:$0xff]
    %v291 = vld [vmem:[#allocation4 + $0x1f0] sm:$0xff]
    %v292 = vld [vmem:[#allocation4 + $0x1f8] sm:$0xff]
    %v293 = vld [vmem:[%s3] sm:$0xff]
    %v294 = vld [vmem:[%s3 + $0x8] sm:$0xff]
    %v295 = vld [vmem:[%s3 + $0x10] sm:$0xff]
    %v296 = vld [vmem:[%s3 + $0x18] sm:$0xff]
    %v297 = vld [vmem:[%s3 + $0x20] sm:$0xff]
    %v298 = vld [vmem:[%s3 + $0x28] sm:$0xff]
    %v299 = vld [vmem:[%s3 + $0x30] sm:$0xff]
    %v300 = vld [vmem:[%s3 + $0x38] sm:$0xff]
    %v301 = vld [vmem:[%s3 + $0x40] sm:$0xff]
    %v302 = vld [vmem:[%s3 + $0x48] sm:$0xff]
    %v303 = vld [vmem:[%s3 + $0x50] sm:$0xff]
    %v304 = vld [vmem:[%s3 + $0x58] sm:$0xff]
    %v305 = vld [vmem:[%s3 + $0x60] sm:$0xff]
    %v306 = vld [vmem:[%s3 + $0x68] sm:$0xff]
    %v307 = vld [vmem:[%s3 + $0x70] sm:$0xff]
    %v308 = vld [vmem:[%s3 + $0x78] sm:$0xff]
    %310 = vset.pattern.permute.xlu0 0
    %311 = vperm.xlu0 %310, %v293
    %v312 = vpop.permute.xlu0 %311
    %315 = vset.pattern.permute.xlu0 0
    %316 = vperm.xlu0 %315, %v294
    %v317 = vpop.permute.xlu0 %316
    %320 = vset.pattern.permute.xlu0 0
    %321 = vperm.xlu0 %320, %v295
    %v322 = vpop.permute.xlu0 %321
    %325 = vset.pattern.permute.xlu0 0
    %326 = vperm.xlu0 %325, %v296
    %v327 = vpop.permute.xlu0 %326
    %330 = vset.pattern.permute.xlu0 0
    %331 = vperm.xlu0 %330, %v297
    %v332 = vpop.permute.xlu0 %331
    %335 = vset.pattern.permute.xlu0 0
    %336 = vperm.xlu0 %335, %v298
    %v337 = vpop.permute.xlu0 %336
    %340 = vset.pattern.permute.xlu0 0
    %341 = vperm.xlu0 %340, %v299
    %v342 = vpop.permute.xlu0 %341
    %345 = vset.pattern.permute.xlu0 0
    %346 = vperm.xlu0 %345, %v300
    %v347 = vpop.permute.xlu0 %346
    %350 = vset.pattern.permute.xlu0 0
    %351 = vperm.xlu0 %350, %v301
    %v352 = vpop.permute.xlu0 %351
    %355 = vset.pattern.permute.xlu0 0
    %356 = vperm.xlu0 %355, %v302
    %v357 = vpop.permute.xlu0 %356
    %360 = vset.pattern.permute.xlu0 0
    %361 = vperm.xlu0 %360, %v303
    %v362 = vpop.permute.xlu0 %361
    %365 = vset.pattern.permute.xlu0 0
    %366 = vperm.xlu0 %365, %v304
    %v367 = vpop.permute.xlu0 %366
    %370 = vset.pattern.permute.xlu0 0
    %371 = vperm.xlu0 %370, %v305
    %v372 = vpop.permute.xlu0 %371
    %375 = vset.pattern.permute.xlu0 0
    %376 = vperm.xlu0 %375, %v306
    %v377 = vpop.permute.xlu0 %376
    %380 = vset.pattern.permute.xlu0 0
    %381 = vperm.xlu0 %380, %v307
    %v382 = vpop.permute.xlu0 %381
    %385 = vset.pattern.permute.xlu0 0
    %386 = vperm.xlu0 %385, %v308
    %v387 = vpop.permute.xlu0 %386
    %v389 = vld [vmem:[%s4] sm:$0xff]
    %v390 = vld [vmem:[%s4 + $0x8] sm:$0xff]
    %v391 = vld [vmem:[%s4 + $0x10] sm:$0xff]
    %v392 = vld [vmem:[%s4 + $0x18] sm:$0xff]
    %v393 = vld [vmem:[%s4 + $0x20] sm:$0xff]
    %v394 = vld [vmem:[%s4 + $0x28] sm:$0xff]
    %v395 = vld [vmem:[%s4 + $0x30] sm:$0xff]
    %v396 = vld [vmem:[%s4 + $0x38] sm:$0xff]
    %v397 = vld [vmem:[%s4 + $0x40] sm:$0xff]
    %v398 = vld [vmem:[%s4 + $0x48] sm:$0xff]
    %v399 = vld [vmem:[%s4 + $0x50] sm:$0xff]
    %v400 = vld [vmem:[%s4 + $0x58] sm:$0xff]
    %v401 = vld [vmem:[%s4 + $0x60] sm:$0xff]
    %v402 = vld [vmem:[%s4 + $0x68] sm:$0xff]
    %v403 = vld [vmem:[%s4 + $0x70] sm:$0xff]
    %v404 = vld [vmem:[%s4 + $0x78] sm:$0xff]
    %406 = vset.pattern.permute.xlu0 0
    %407 = vperm.xlu0 %406, %v389
    %v408 = vpop.permute.xlu0 %407
    %411 = vset.pattern.permute.xlu0 0
    %412 = vperm.xlu0 %411, %v390
    %v413 = vpop.permute.xlu0 %412
    %416 = vset.pattern.permute.xlu0 0
    %417 = vperm.xlu0 %416, %v391
    %v418 = vpop.permute.xlu0 %417
    %421 = vset.pattern.permute.xlu0 0
    %422 = vperm.xlu0 %421, %v392
    %v423 = vpop.permute.xlu0 %422
    %426 = vset.pattern.permute.xlu0 0
    %427 = vperm.xlu0 %426, %v393
    %v428 = vpop.permute.xlu0 %427
    %431 = vset.pattern.permute.xlu0 0
    %432 = vperm.xlu0 %431, %v394
    %v433 = vpop.permute.xlu0 %432
    %436 = vset.pattern.permute.xlu0 0
    %437 = vperm.xlu0 %436, %v395
    %v438 = vpop.permute.xlu0 %437
    %441 = vset.pattern.permute.xlu0 0
    %442 = vperm.xlu0 %441, %v396
    %v443 = vpop.permute.xlu0 %442
    %446 = vset.pattern.permute.xlu0 0
    %447 = vperm.xlu0 %446, %v397
    %v448 = vpop.permute.xlu0 %447
    %451 = vset.pattern.permute.xlu0 0
    %452 = vperm.xlu0 %451, %v398
    %v453 = vpop.permute.xlu0 %452
    %456 = vset.pattern.permute.xlu0 0
    %457 = vperm.xlu0 %456, %v399
    %v458 = vpop.permute.xlu0 %457
    %461 = vset.pattern.permute.xlu0 0
    %462 = vperm.xlu0 %461, %v400
    %v463 = vpop.permute.xlu0 %462
    %466 = vset.pattern.permute.xlu0 0
    %467 = vperm.xlu0 %466, %v401
    %v468 = vpop.permute.xlu0 %467
    %471 = vset.pattern.permute.xlu0 0
    %472 = vperm.xlu0 %471, %v402
    %v473 = vpop.permute.xlu0 %472
    %476 = vset.pattern.permute.xlu0 0
    %477 = vperm.xlu0 %476, %v403
    %v478 = vpop.permute.xlu0 %477
    %481 = vset.pattern.permute.xlu0 0
    %482 = vperm.xlu0 %481, %v404
    %v483 = vpop.permute.xlu0 %482
    %v485 = vld [vmem:[%s5] sm:$0xff]
    %v486 = vld [vmem:[%s5 + $0x8] sm:$0xff]
    %v487 = vld [vmem:[%s5 + $0x10] sm:$0xff]
    %v488 = vld [vmem:[%s5 + $0x18] sm:$0xff]
    %v489 = vld [vmem:[%s5 + $0x20] sm:$0xff]
    %v490 = vld [vmem:[%s5 + $0x28] sm:$0xff]
    %v491 = vld [vmem:[%s5 + $0x30] sm:$0xff]
    %v492 = vld [vmem:[%s5 + $0x38] sm:$0xff]
    %v493 = vld [vmem:[%s5 + $0x40] sm:$0xff]
    %v494 = vld [vmem:[%s5 + $0x48] sm:$0xff]
    %v495 = vld [vmem:[%s5 + $0x50] sm:$0xff]
    %v496 = vld [vmem:[%s5 + $0x58] sm:$0xff]
    %v497 = vld [vmem:[%s5 + $0x60] sm:$0xff]
    %v498 = vld [vmem:[%s5 + $0x68] sm:$0xff]
    %v499 = vld [vmem:[%s5 + $0x70] sm:$0xff]
    %v500 = vld [vmem:[%s5 + $0x78] sm:$0xff]
    %502 = vset.pattern.permute.xlu0 0
    %503 = vperm.xlu0 %502, %v485
    %v504 = vpop.permute.xlu0 %503
    %507 = vset.pattern.permute.xlu0 0
    %508 = vperm.xlu0 %507, %v486
    %v509 = vpop.permute.xlu0 %508
    %512 = vset.pattern.permute.xlu0 0
    %513 = vperm.xlu0 %512, %v487
    %v514 = vpop.permute.xlu0 %513
    %517 = vset.pattern.permute.xlu0 0
    %518 = vperm.xlu0 %517, %v488
    %v519 = vpop.permute.xlu0 %518
    %522 = vset.pattern.permute.xlu0 0
    %523 = vperm.xlu0 %522, %v489
    %v524 = vpop.permute.xlu0 %523
    %527 = vset.pattern.permute.xlu0 0
    %528 = vperm.xlu0 %527, %v490
    %v529 = vpop.permute.xlu0 %528
    %532 = vset.pattern.permute.xlu0 0
    %533 = vperm.xlu0 %532, %v491
    %v534 = vpop.permute.xlu0 %533
    %537 = vset.pattern.permute.xlu0 0
    %538 = vperm.xlu0 %537, %v492
    %v539 = vpop.permute.xlu0 %538
    %542 = vset.pattern.permute.xlu0 0
    %543 = vperm.xlu0 %542, %v493
    %v544 = vpop.permute.xlu0 %543
    %547 = vset.pattern.permute.xlu0 0
    %548 = vperm.xlu0 %547, %v494
    %v549 = vpop.permute.xlu0 %548
    %552 = vset.pattern.permute.xlu0 0
    %553 = vperm.xlu0 %552, %v495
    %v554 = vpop.permute.xlu0 %553
    %557 = vset.pattern.permute.xlu0 0
    %558 = vperm.xlu0 %557, %v496
    %v559 = vpop.permute.xlu0 %558
    %562 = vset.pattern.permute.xlu0 0
    %563 = vperm.xlu0 %562, %v497
    %v564 = vpop.permute.xlu0 %563
    %567 = vset.pattern.permute.xlu0 0
    %568 = vperm.xlu0 %567, %v498
    %v569 = vpop.permute.xlu0 %568
    %572 = vset.pattern.permute.xlu0 0
    %573 = vperm.xlu0 %572, %v499
    %v574 = vpop.permute.xlu0 %573
    %577 = vset.pattern.permute.xlu0 0
    %578 = vperm.xlu0 %577, %v500
    %v579 = vpop.permute.xlu0 %578
    %581 = vmatprep.subr.mxu0 %v230
    %582 = vmatpush1.msra.mxu0 %v229
    %583 = vmatprep.subr.mxu0 %v234
    %584 = vmatpush1.msra.mxu0 %v233
    %585 = vmatprep.subr.mxu0 %v238
    %586 = vmatpush1.msra.mxu0 %v237
    %587 = vmatprep.subr.mxu0 %v242
    %588 = vmatpush1.msra.mxu0 %v241
    %589 = vmatprep.subr.mxu0 %v246
    %590 = vmatpush1.msra.mxu0 %v245
    %591 = vmatprep.subr.mxu0 %v250
    %592 = vmatpush1.msra.mxu0 %v249
    %593 = vmatprep.subr.mxu0 %v254
    %594 = vmatpush1.msra.mxu0 %v253
    %595 = vmatprep.subr.mxu0 %v258
    %596 = vmatpush1.msra.mxu0 %v257
    %597 = vmatprep.subr.mxu0 %v262
    %598 = vmatpush1.msra.mxu0 %v261
    %599 = vmatprep.subr.mxu0 %v266
    %600 = vmatpush1.msra.mxu0 %v265
    %601 = vmatprep.subr.mxu0 %v270
    %602 = vmatpush1.msra.mxu0 %v269
    %603 = vmatprep.subr.mxu0 %v274
    %604 = vmatpush1.msra.mxu0 %v273
    %605 = vmatprep.subr.mxu0 %v278
    %606 = vmatpush1.msra.mxu0 %v277
    %607 = vmatprep.subr.mxu0 %v282
    %608 = vmatpush1.msra.mxu0 %v281
    %609 = vmatprep.subr.mxu0 %v286
    %610 = vmatpush1.msra.mxu0 %v285
    %611 = vmatprep.subr.mxu0 %v290
    %612 = vmatpush1.msra.mxu0 %v289
    %613 = vmatprep.subr.mxu0 0.0
    %614 = vmatpush1.msra.mxu0 0.0
    %615 = vmatprep.subr.mxu0 0.0
    %616 = vmatpush1.msra.mxu0 0.0
    %617 = vmatprep.subr.mxu0 0.0
    %618 = vmatpush1.msra.mxu0 0.0
    %619 = vmatprep.subr.mxu0 0.0
    %620 = vmatpush1.msra.mxu0 0.0
    %621 = vmatprep.subr.mxu0 0.0
    %622 = vmatpush1.msra.mxu0 0.0
    %623 = vmatprep.subr.mxu0 0.0
    %624 = vmatpush1.msra.mxu0 0.0
    %625 = vmatprep.subr.mxu0 0.0
    %626 = vmatpush1.msra.mxu0 0.0
    %627 = vmatprep.subr.mxu0 0.0
    %628 = vmatpush1.msra.mxu0 0.0
    %629 = vmatprep.subr.mxu0 0.0
    %630 = vmatpush1.msra.mxu0 0.0
    %631 = vmatprep.subr.mxu0 0.0
    %632 = vmatpush1.msra.mxu0 0.0
    %633 = vmatprep.subr.mxu0 0.0
    %634 = vmatpush1.msra.mxu0 0.0
    %635 = vmatprep.subr.mxu0 0.0
    %636 = vmatpush1.msra.mxu0 0.0
    %637 = vmatprep.subr.mxu0 0.0
    %638 = vmatpush1.msra.mxu0 0.0
    %639 = vmatprep.subr.mxu0 0.0
    %640 = vmatpush1.msra.mxu0 0.0
    %641 = vmatprep.subr.mxu0 0.0
    %642 = vmatpush1.msra.mxu0 0.0
    %643 = vmatprep.subr.mxu0 0.0
    %644 = vmatpush1.msra.mxu0 0.0
    %645 = vmatprep.mubr.f32.mxu0 0.0
    %646 = vmatmul.mubr.f32.gmra.mrb[0].mxu0 %v213
    %v647 = vpop.f32.mrb[0].mxu0
    %v648 = vadd.f32 0.0, %v647
    %v649 = vpop.f32.mrb[0].mxu0
    %v650 = vadd.f32 0.0, %v649
    %651 = vmatprep.mubr.f32.mxu0 0.0
    %652 = vmatmul.mubr.f32.gmra.mrb[0].mxu0 %v214
    %v653 = vpop.f32.mrb[0].mxu0
    %v654 = vadd.f32 0.0, %v653
    %v655 = vpop.f32.mrb[0].mxu0
    %v656 = vadd.f32 0.0, %v655
    %657 = vmatprep.mubr.f32.mxu0 0.0
    %658 = vmatmul.mubr.f32.gmra.mrb[0].mxu0 %v215
    %v659 = vpop.f32.mrb[0].mxu0
    %v660 = vadd.f32 0.0, %v659
    %v661 = vpop.f32.mrb[0].mxu0
    %v662 = vadd.f32 0.0, %v661
    %663 = vmatprep.mubr.f32.mxu0 0.0
    %664 = vmatmul.mubr.f32.gmra.mrb[0].mxu0 %v216
    %v665 = vpop.f32.mrb[0].mxu0
    %v666 = vadd.f32 0.0, %v665
    %v667 = vpop.f32.mrb[0].mxu0
    %v668 = vadd.f32 0.0, %v667
    %669 = vmatprep.mubr.f32.mxu0 0.0
    %670 = vmatmul.mubr.f32.gmra.mrb[0].mxu0 %v217
    %v671 = vpop.f32.mrb[0].mxu0
    %v672 = vadd.f32 0.0, %v671
    %v673 = vpop.f32.mrb[0].mxu0
    %v674 = vadd.f32 0.0, %v673
    %675 = vmatprep.mubr.f32.mxu0 0.0
    %676 = vmatmul.mubr.f32.gmra.mrb[0].mxu0 %v218
    %v677 = vpop.f32.mrb[0].mxu0
    %v678 = vadd.f32 0.0, %v677
    %v679 = vpop.f32.mrb[0].mxu0
    %v680 = vadd.f32 0.0, %v679
    %681 = vmatprep.mubr.f32.mxu0 0.0
    %682 = vmatmul.mubr.f32.gmra.mrb[0].mxu0 %v219
    %v683 = vpop.f32.mrb[0].mxu0
    %v684 = vadd.f32 0.0, %v683
    %v685 = vpop.f32.mrb[0].mxu0
    %v686 = vadd.f32 0.0, %v685
    %687 = vmatprep.mubr.f32.mxu0 0.0
    %688 = vmatmul.mubr.f32.gmra.mrb[0].mxu0 %v220
    %v689 = vpop.f32.mrb[0].mxu0
    %v690 = vadd.f32 0.0, %v689
    %v691 = vpop.f32.mrb[0].mxu0
    %v692 = vadd.f32 0.0, %v691
    %693 = vmatprep.mubr.f32.mxu0 0.0
    %694 = vmatmul.mubr.f32.gmra.mrb[0].mxu0 %v221
    %v695 = vpop.f32.mrb[0].mxu0
    %v696 = vadd.f32 0.0, %v695
    %v697 = vpop.f32.mrb[0].mxu0
    %v698 = vadd.f32 0.0, %v697
    %699 = vmatprep.mubr.f32.mxu0 0.0
    %700 = vmatmul.mubr.f32.gmra.mrb[0].mxu0 %v222
    %v701 = vpop.f32.mrb[0].mxu0
    %v702 = vadd.f32 0.0, %v701
    %v703 = vpop.f32.mrb[0].mxu0
    %v704 = vadd.f32 0.0, %v703
    %705 = vmatprep.mubr.f32.mxu0 0.0
    %706 = vmatmul.mubr.f32.gmra.mrb[0].mxu0 %v223
    %v707 = vpop.f32.mrb[0].mxu0
    %v708 = vadd.f32 0.0, %v707
    %v709 = vpop.f32.mrb[0].mxu0
    %v710 = vadd.f32 0.0, %v709
    %711 = vmatprep.mubr.f32.mxu0 0.0
    %712 = vmatmul.mubr.f32.gmra.mrb[0].mxu0 %v224
    %v713 = vpop.f32.mrb[0].mxu0
    %v714 = vadd.f32 0.0, %v713
    %v715 = vpop.f32.mrb[0].mxu0
    %v716 = vadd.f32 0.0, %v715
    %717 = vmatprep.mubr.f32.mxu0 0.0
    %718 = vmatmul.mubr.f32.gmra.mrb[0].mxu0 %v225
    %v719 = vpop.f32.mrb[0].mxu0
    %v720 = vadd.f32 0.0, %v719
    %v721 = vpop.f32.mrb[0].mxu0
    %v722 = vadd.f32 0.0, %v721
    %723 = vmatprep.mubr.f32.mxu0 0.0
    %724 = vmatmul.mubr.f32.gmra.mrb[0].mxu0 %v226
    %v725 = vpop.f32.mrb[0].mxu0
    %v726 = vadd.f32 0.0, %v725
    %v727 = vpop.f32.mrb[0].mxu0
    %v728 = vadd.f32 0.0, %v727
    %729 = vmatprep.mubr.f32.mxu0 0.0
    %730 = vmatmul.mubr.f32.gmra.mrb[0].mxu0 %v227
    %v731 = vpop.f32.mrb[0].mxu0
    %v732 = vadd.f32 0.0, %v731
    %v733 = vpop.f32.mrb[0].mxu0
    %v734 = vadd.f32 0.0, %v733
    %735 = vmatprep.mubr.f32.mxu0 0.0
    %736 = vmatmul.mubr.f32.gmra.mrb[0].mxu0 %v228
    %v737 = vpop.f32.mrb[0].mxu0
    %v738 = vadd.f32 0.0, %v737
    %v739 = vpop.f32.mrb[0].mxu0
    %v740 = vadd.f32 0.0, %v739
    %741 = vdwg.mxu0
    %742 = vmatprep.subr.mxu0 %v232
    %743 = vmatpush1.msra.mxu0 %v231
    %744 = vmatprep.subr.mxu0 %v236
    %745 = vmatpush1.msra.mxu0 %v235
    %746 = vmatprep.subr.mxu0 %v240
    %747 = vmatpush1.msra.mxu0 %v239
    %748 = vmatprep.subr.mxu0 %v244
    %749 = vmatpush1.msra.mxu0 %v243
    %750 = vmatprep.subr.mxu0 %v248
    %751 = vmatpush1.msra.mxu0 %v247
    %752 = vmatprep.subr.mxu0 %v252
    %753 = vmatpush1.msra.mxu0 %v251
    %754 = vmatprep.subr.mxu0 %v256
    %755 = vmatpush1.msra.mxu0 %v255
    %756 = vmatprep.subr.mxu0 %v260
    %757 = vmatpush1.msra.mxu0 %v259
    %758 = vmatprep.subr.mxu0 %v264
    %759 = vmatpush1.msra.mxu0 %v263
    %760 = vmatprep.subr.mxu0 %v268
    %761 = vmatpush1.msra.mxu0 %v267
    %762 = vmatprep.subr.mxu0 %v272
    %763 = vmatpush1.msra.mxu0 %v271
    %764 = vmatprep.subr.mxu0 %v276
    %765 = vmatpush1.msra.mxu0 %v275
    %766 = vmatprep.subr.mxu0 %v280
    %767 = vmatpush1.msra.mxu0 %v279
    %768 = vmatprep.subr.mxu0 %v284
    %769 = vmatpush1.msra.mxu0 %v283
    %770 = vmatprep.subr.mxu0 %v288
    %771 = vmatpush1.msra.mxu0 %v287
    %772 = vmatprep.subr.mxu0 %v292
    %773 = vmatpush1.msra.mxu0 %v291
    %774 = vmatprep.subr.mxu0 0.0
    %775 = vmatpush1.msra.mxu0 0.0
    %776 = vmatprep.subr.mxu0 0.0
    %777 = vmatpush1.msra.mxu0 0.0
    %778 = vmatprep.subr.mxu0 0.0
    %779 = vmatpush1.msra.mxu0 0.0
    %780 = vmatprep.subr.mxu0 0.0
    %781 = vmatpush1.msra.mxu0 0.0
    %782 = vmatprep.subr.mxu0 0.0
    %783 = vmatpush1.msra.mxu0 0.0
    %784 = vmatprep.subr.mxu0 0.0
    %785 = vmatpush1.msra.mxu0 0.0
    %786 = vmatprep.subr.mxu0 0.0
    %787 = vmatpush1.msra.mxu0 0.0
    %788 = vmatprep.subr.mxu0 0.0
    %789 = vmatpush1.msra.mxu0 0.0
    %790 = vmatprep.subr.mxu0 0.0
    %791 = vmatpush1.msra.mxu0 0.0
    %792 = vmatprep.subr.mxu0 0.0
    %793 = vmatpush1.msra.mxu0 0.0
    %794 = vmatprep.subr.mxu0 0.0
    %795 = vmatpush1.msra.mxu0 0.0
    %796 = vmatprep.subr.mxu0 0.0
    %797 = vmatpush1.msra.mxu0 0.0
    %798 = vmatprep.subr.mxu0 0.0
    %799 = vmatpush1.msra.mxu0 0.0
    %800 = vmatprep.subr.mxu0 0.0
    %801 = vmatpush1.msra.mxu0 0.0
    %802 = vmatprep.subr.mxu0 0.0
    %803 = vmatpush1.msra.mxu0 0.0
    %804 = vmatprep.subr.mxu0 0.0
    %805 = vmatpush1.msra.mxu0 0.0
    %806 = vmatprep.mubr.f32.mxu0 0.0
    %807 = vmatmul.mubr.f32.gmra.mrb[0].mxu0 %v213
    %v808 = vpop.f32.mrb[0].mxu0
    %v809 = vadd.f32 0.0, %v808
    %v810 = vpop.f32.mrb[0].mxu0
    %v811 = vadd.f32 0.0, %v810
    %812 = vmatprep.mubr.f32.mxu0 0.0
    %813 = vmatmul.mubr.f32.gmra.mrb[0].mxu0 %v214
    %v814 = vpop.f32.mrb[0].mxu0
    %v815 = vadd.f32 0.0, %v814
    %v816 = vpop.f32.mrb[0].mxu0
    %v817 = vadd.f32 0.0, %v816
    %818 = vmatprep.mubr.f32.mxu0 0.0
    %819 = vmatmul.mubr.f32.gmra.mrb[0].mxu0 %v215
    %v820 = vpop.f32.mrb[0].mxu0
    %v821 = vadd.f32 0.0, %v820
    %v822 = vpop.f32.mrb[0].mxu0
    %v823 = vadd.f32 0.0, %v822
    %824 = vmatprep.mubr.f32.mxu0 0.0
    %825 = vmatmul.mubr.f32.gmra.mrb[0].mxu0 %v216
    %v826 = vpop.f32.mrb[0].mxu0
    %v827 = vadd.f32 0.0, %v826
    %v828 = vpop.f32.mrb[0].mxu0
    %v829 = vadd.f32 0.0, %v828
    %830 = vmatprep.mubr.f32.mxu0 0.0
    %831 = vmatmul.mubr.f32.gmra.mrb[0].mxu0 %v217
    %v832 = vpop.f32.mrb[0].mxu0
    %v833 = vadd.f32 0.0, %v832
    %v834 = vpop.f32.mrb[0].mxu0
    %v835 = vadd.f32 0.0, %v834
    %836 = vmatprep.mubr.f32.mxu0 0.0
    %837 = vmatmul.mubr.f32.gmra.mrb[0].mxu0 %v218
    %v838 = vpop.f32.mrb[0].mxu0
    %v839 = vadd.f32 0.0, %v838
    %v840 = vpop.f32.mrb[0].mxu0
    %v841 = vadd.f32 0.0, %v840
    %842 = vmatprep.mubr.f32.mxu0 0.0
    %843 = vmatmul.mubr.f32.gmra.mrb[0].mxu0 %v219
    %v844 = vpop.f32.mrb[0].mxu0
    %v845 = vadd.f32 0.0, %v844
    %v846 = vpop.f32.mrb[0].mxu0
    %v847 = vadd.f32 0.0, %v846
    %848 = vmatprep.mubr.f32.mxu0 0.0
    %849 = vmatmul.mubr.f32.gmra.mrb[0].mxu0 %v220
    %v850 = vpop.f32.mrb[0].mxu0
    %v851 = vadd.f32 0.0, %v850
    %v852 = vpop.f32.mrb[0].mxu0
    %v853 = vadd.f32 0.0, %v852
    %854 = vmatprep.mubr.f32.mxu0 0.0
    %855 = vmatmul.mubr.f32.gmra.mrb[0].mxu0 %v221
    %v856 = vpop.f32.mrb[0].mxu0
    %v857 = vadd.f32 0.0, %v856
    %v858 = vpop.f32.mrb[0].mxu0
    %v859 = vadd.f32 0.0, %v858
    %860 = vmatprep.mubr.f32.mxu0 0.0
    %861 = vmatmul.mubr.f32.gmra.mrb[0].mxu0 %v222
    %v862 = vpop.f32.mrb[0].mxu0
    %v863 = vadd.f32 0.0, %v862
    %v864 = vpop.f32.mrb[0].mxu0
    %v865 = vadd.f32 0.0, %v864
    %866 = vmatprep.mubr.f32.mxu0 0.0
    %867 = vmatmul.mubr.f32.gmra.mrb[0].mxu0 %v223
    %v868 = vpop.f32.mrb[0].mxu0
    %v869 = vadd.f32 0.0, %v868
    %v870 = vpop.f32.mrb[0].mxu0
    %v871 = vadd.f32 0.0, %v870
    %872 = vmatprep.mubr.f32.mxu0 0.0
    %873 = vmatmul.mubr.f32.gmra.mrb[0].mxu0 %v224
    %v874 = vpop.f32.mrb[0].mxu0
    %v875 = vadd.f32 0.0, %v874
    %v876 = vpop.f32.mrb[0].mxu0
    %v877 = vadd.f32 0.0, %v876
    %878 = vmatprep.mubr.f32.mxu0 0.0
    %879 = vmatmul.mubr.f32.gmra.mrb[0].mxu0 %v225
    %v880 = vpop.f32.mrb[0].mxu0
    %v881 = vadd.f32 0.0, %v880
    %v882 = vpop.f32.mrb[0].mxu0
    %v883 = vadd.f32 0.0, %v882
    %884 = vmatprep.mubr.f32.mxu0 0.0
    %885 = vmatmul.mubr.f32.gmra.mrb[0].mxu0 %v226
    %v886 = vpop.f32.mrb[0].mxu0
    %v887 = vadd.f32 0.0, %v886
    %v888 = vpop.f32.mrb[0].mxu0
    %v889 = vadd.f32 0.0, %v888
    %890 = vmatprep.mubr.f32.mxu0 0.0
    %891 = vmatmul.mubr.f32.gmra.mrb[0].mxu0 %v227
    %v892 = vpop.f32.mrb[0].mxu0
    %v893 = vadd.f32 0.0, %v892
    %v894 = vpop.f32.mrb[0].mxu0
    %v895 = vadd.f32 0.0, %v894
    %896 = vmatprep.mubr.f32.mxu0 0.0
    %897 = vmatmul.mubr.f32.gmra.mrb[0].mxu0 %v228
    %v898 = vpop.f32.mrb[0].mxu0
    %v899 = vadd.f32 0.0, %v898
    %v900 = vpop.f32.mrb[0].mxu0
    %v901 = vadd.f32 0.0, %v900
    %902 = vdwg.mxu0
    %v903 = vpack.c.bf16 %v654, %v648
    %v904 = vpack.c.bf16 %v666, %v660
    %v905 = vpack.c.bf16 %v678, %v672
    %v906 = vpack.c.bf16 %v690, %v684
    %v907 = vpack.c.bf16 %v702, %v696
    %v908 = vpack.c.bf16 %v714, %v708
    %v909 = vpack.c.bf16 %v726, %v720
    %v910 = vpack.c.bf16 %v738, %v732
    %v911 = vpack.c.bf16 %v656, %v650
    %v912 = vpack.c.bf16 %v668, %v662
    %v913 = vpack.c.bf16 %v680, %v674
    %v914 = vpack.c.bf16 %v692, %v686
    %v915 = vpack.c.bf16 %v704, %v698
    %v916 = vpack.c.bf16 %v716, %v710
    %v917 = vpack.c.bf16 %v728, %v722
    %v918 = vpack.c.bf16 %v740, %v734
    %s919 = smul.u32 4, 16
    %s920 = smul.u32 %s919, 2
    %s921 = sshll.u32 %s920, 4
    %922 = dma.done [#allocation3], %s921
    %v923 = vld [vmem:[#allocation2] sm:$0xff]
    %v924 = vld [vmem:[#allocation2 + $0x8] sm:$0xff]
    %v925 = vld [vmem:[#allocation2 + $0x10] sm:$0xff]
    %v926 = vld [vmem:[#allocation2 + $0x18] sm:$0xff]
    %v927 = vld [vmem:[#allocation2 + $0x20] sm:$0xff]
    %v928 = vld [vmem:[#allocation2 + $0x28] sm:$0xff]
    %v929 = vld [vmem:[#allocation2 + $0x30] sm:$0xff]
    %v930 = vld [vmem:[#allocation2 + $0x38] sm:$0xff]
    %v931 = vld [vmem:[#allocation2 + $0x40] sm:$0xff]
    %v932 = vld [vmem:[#allocation2 + $0x48] sm:$0xff]
    %v933 = vld [vmem:[#allocation2 + $0x50] sm:$0xff]
    %v934 = vld [vmem:[#allocation2 + $0x58] sm:$0xff]
    %v935 = vld [vmem:[#allocation2 + $0x60] sm:$0xff]
    %v936 = vld [vmem:[#allocation2 + $0x68] sm:$0xff]
    %v937 = vld [vmem:[#allocation2 + $0x70] sm:$0xff]
    %v938 = vld [vmem:[#allocation2 + $0x78] sm:$0xff]
    %939 = vmatprep.subr.bf16.mxu0 0
    %940 = vmatpush1.bf16.msra.mxu0 %v903
    %941 = vmatprep.subr.bf16.mxu0 0
    %942 = vmatpush1.bf16.msra.mxu0 %v904
    %943 = vmatprep.subr.bf16.mxu0 0
    %944 = vmatpush1.bf16.msra.mxu0 %v905
    %945 = vmatprep.subr.bf16.mxu0 0
    %946 = vmatpush1.bf16.msra.mxu0 %v906
    %947 = vmatprep.subr.bf16.mxu0 0
    %948 = vmatpush1.bf16.msra.mxu0 %v907
    %949 = vmatprep.subr.bf16.mxu0 0
    %950 = vmatpush1.bf16.msra.mxu0 %v908
    %951 = vmatprep.subr.bf16.mxu0 0
    %952 = vmatpush1.bf16.msra.mxu0 %v909
    %953 = vmatprep.subr.bf16.mxu0 0
    %954 = vmatpush1.bf16.msra.mxu0 %v910
    %955 = vmatprep.subr.bf16.mxu0 0
    %956 = vmatpush1.bf16.msra.mxu0 %v911
    %957 = vmatprep.subr.bf16.mxu0 0
    %958 = vmatpush1.bf16.msra.mxu0 %v912
    %959 = vmatprep.subr.bf16.mxu0 0
    %960 = vmatpush1.bf16.msra.mxu0 %v913
    %961 = vmatprep.subr.bf16.mxu0 0
    %962 = vmatpush1.bf16.msra.mxu0 %v914
    %963 = vmatprep.subr.bf16.mxu0 0
    %964 = vmatpush1.bf16.msra.mxu0 %v915
    %965 = vmatprep.subr.bf16.mxu0 0
    %966 = vmatpush1.bf16.msra.mxu0 %v916
    %967 = vmatprep.subr.bf16.mxu0 0
    %968 = vmatpush1.bf16.msra.mxu0 %v917
    %969 = vmatprep.subr.bf16.mxu0 0
    %970 = vmatpush1.bf16.msra.mxu0 %v918
    %971 = vmatprep.mubr.bf16.mxu0 %v924
    %972 = vmatmul.mubr.bf16.gmra.mrb[0].mxu0 %v923
    %v973 = vpop.f32.mrb[0].mxu0
    %v974 = vadd.f32 0.0, %v973
    %v975 = vpop.f32.mrb[0].mxu0
    %v976 = vpop.f32.mrb[0].mxu0
    %v977 = vadd.f32 0.0, %v976
    %v978 = vpop.f32.mrb[0].mxu0
    %979 = vmatprep.mubr.bf16.mxu0 %v926
    %980 = vmatmul.mubr.bf16.gmra.mrb[0].mxu0 %v925
    %v981 = vpop.f32.mrb[0].mxu0
    %v982 = vadd.f32 0.0, %v981
    %v983 = vpop.f32.mrb[0].mxu0
    %v984 = vpop.f32.mrb[0].mxu0
    %v985 = vadd.f32 0.0, %v984
    %v986 = vpop.f32.mrb[0].mxu0
    %987 = vmatprep.mubr.bf16.mxu0 %v928
    %988 = vmatmul.mubr.bf16.gmra.mrb[0].mxu0 %v927
    %v989 = vpop.f32.mrb[0].mxu0
    %v990 = vadd.f32 0.0, %v989
    %v991 = vpop.f32.mrb[0].mxu0
    %v992 = vpop.f32.mrb[0].mxu0
    %v993 = vadd.f32 0.0, %v992
    %v994 = vpop.f32.mrb[0].mxu0
    %995 = vmatprep.mubr.bf16.mxu0 %v930
    %996 = vmatmul.mubr.bf16.gmra.mrb[0].mxu0 %v929
    %v997 = vpop.f32.mrb[0].mxu0
    %v998 = vadd.f32 0.0, %v997
    %v999 = vpop.f32.mrb[0].mxu0
    %v1000 = vpop.f32.mrb[0].mxu0
    %v1001 = vadd.f32 0.0, %v1000
    %v1002 = vpop.f32.mrb[0].mxu0
    %1003 = vmatprep.mubr.bf16.mxu0 %v932
    %1004 = vmatmul.mubr.bf16.gmra.mrb[0].mxu0 %v931
    %v1005 = vpop.f32.mrb[0].mxu0
    %v1006 = vadd.f32 0.0, %v1005
    %v1007 = vpop.f32.mrb[0].mxu0
    %v1008 = vpop.f32.mrb[0].mxu0
    %v1009 = vadd.f32 0.0, %v1008
    %v1010 = vpop.f32.mrb[0].mxu0
    %1011 = vmatprep.mubr.bf16.mxu0 %v934
    %1012 = vmatmul.mubr.bf16.gmra.mrb[0].mxu0 %v933
    %v1013 = vpop.f32.mrb[0].mxu0
    %v1014 = vadd.f32 0.0, %v1013
    %v1015 = vpop.f32.mrb[0].mxu0
    %v1016 = vpop.f32.mrb[0].mxu0
    %v1017 = vadd.f32 0.0, %v1016
    %v1018 = vpop.f32.mrb[0].mxu0
    %1019 = vmatprep.mubr.bf16.mxu0 %v936
    %1020 = vmatmul.mubr.bf16.gmra.mrb[0].mxu0 %v935
    %v1021 = vpop.f32.mrb[0].mxu0
    %v1022 = vadd.f32 0.0, %v1021
    %v1023 = vpop.f32.mrb[0].mxu0
    %v1024 = vpop.f32.mrb[0].mxu0
    %v1025 = vadd.f32 0.0, %v1024
    %v1026 = vpop.f32.mrb[0].mxu0
    %1027 = vmatprep.mubr.bf16.mxu0 %v938
    %1028 = vmatmul.mubr.bf16.gmra.mrb[0].mxu0 %v937
    %v1029 = vpop.f32.mrb[0].mxu0
    %v1030 = vadd.f32 0.0, %v1029
    %v1031 = vpop.f32.mrb[0].mxu0
    %v1032 = vpop.f32.mrb[0].mxu0
    %v1033 = vadd.f32 0.0, %v1032
    %v1034 = vpop.f32.mrb[0].mxu0
    %1035 = vdwg.mxu0
    %v1036 = vmul.f32 %v312, %v809
    %v1037 = vmul.f32 %v317, %v815
    %v1038 = vmul.f32 %v322, %v821
    %v1039 = vmul.f32 %v327, %v827
    %v1040 = vmul.f32 %v332, %v833
    %v1041 = vmul.f32 %v337, %v839
    %v1042 = vmul.f32 %v342, %v845
    %v1043 = vmul.f32 %v347, %v851
    %v1044 = vmul.f32 %v352, %v857
    %v1045 = vmul.f32 %v357, %v863
    %v1046 = vmul.f32 %v362, %v869
    %v1047 = vmul.f32 %v367, %v875
    %v1048 = vmul.f32 %v372, %v881
    %v1049 = vmul.f32 %v377, %v887
    %v1050 = vmul.f32 %v382, %v893
    %v1051 = vmul.f32 %v387, %v899
    %v1052 = vsub.f32 %v974, %v1036
    %v1053 = vsub.f32 %v977, %v1037
    %v1054 = vsub.f32 %v982, %v1038
    %v1055 = vsub.f32 %v985, %v1039
    %v1056 = vsub.f32 %v990, %v1040
    %v1057 = vsub.f32 %v993, %v1041
    %v1058 = vsub.f32 %v998, %v1042
    %v1059 = vsub.f32 %v1001, %v1043
    %v1060 = vsub.f32 %v1006, %v1044
    %v1061 = vsub.f32 %v1009, %v1045
    %v1062 = vsub.f32 %v1014, %v1046
    %v1063 = vsub.f32 %v1017, %v1047
    %v1064 = vsub.f32 %v1022, %v1048
    %v1065 = vsub.f32 %v1025, %v1049
    %v1066 = vsub.f32 %v1030, %v1050
    %v1067 = vsub.f32 %v1033, %v1051
    %v1068 = vmul.f32 %v408, %v811
    %v1069 = vmul.f32 %v413, %v817
    %v1070 = vmul.f32 %v418, %v823
    %v1071 = vmul.f32 %v423, %v829
    %v1072 = vmul.f32 %v428, %v835
    %v1073 = vmul.f32 %v433, %v841
    %v1074 = vmul.f32 %v438, %v847
    %v1075 = vmul.f32 %v443, %v853
    %v1076 = vmul.f32 %v448, %v859
    %v1077 = vmul.f32 %v453, %v865
    %v1078 = vmul.f32 %v458, %v871
    %v1079 = vmul.f32 %v463, %v877
    %v1080 = vmul.f32 %v468, %v883
    %v1081 = vmul.f32 %v473, %v889
    %v1082 = vmul.f32 %v478, %v895
    %v1083 = vmul.f32 %v483, %v901
    %v1084 = vsub.f32 %v1052, %v1068
    %v1085 = vsub.f32 %v1053, %v1069
    %v1086 = vsub.f32 %v1054, %v1070
    %v1087 = vsub.f32 %v1055, %v1071
    %v1088 = vsub.f32 %v1056, %v1072
    %v1089 = vsub.f32 %v1057, %v1073
    %v1090 = vsub.f32 %v1058, %v1074
    %v1091 = vsub.f32 %v1059, %v1075
    %v1092 = vsub.f32 %v1060, %v1076
    %v1093 = vsub.f32 %v1061, %v1077
    %v1094 = vsub.f32 %v1062, %v1078
    %v1095 = vsub.f32 %v1063, %v1079
    %v1096 = vsub.f32 %v1064, %v1080
    %v1097 = vsub.f32 %v1065, %v1081
    %v1098 = vsub.f32 %v1066, %v1082
    %v1099 = vsub.f32 %v1067, %v1083
    %v1100 = vadd.f32 %v1084, %v213
    %v1101 = vadd.f32 %v1085, %v214
    %v1102 = vadd.f32 %v1086, %v215
    %v1103 = vadd.f32 %v1087, %v216
    %v1104 = vadd.f32 %v1088, %v217
    %v1105 = vadd.f32 %v1089, %v218
    %v1106 = vadd.f32 %v1090, %v219
    %v1107 = vadd.f32 %v1091, %v220
    %v1108 = vadd.f32 %v1092, %v221
    %v1109 = vadd.f32 %v1093, %v222
    %v1110 = vadd.f32 %v1094, %v223
    %v1111 = vadd.f32 %v1095, %v224
    %v1112 = vadd.f32 %v1096, %v225
    %v1113 = vadd.f32 %v1097, %v226
    %v1114 = vadd.f32 %v1098, %v227
    %v1115 = vadd.f32 %v1099, %v228
    %v1116 = vmul.f32 %v408, %v213
    %v1117 = vmul.f32 %v413, %v214
    %v1118 = vmul.f32 %v418, %v215
    %v1119 = vmul.f32 %v423, %v216
    %v1120 = vmul.f32 %v428, %v217
    %v1121 = vmul.f32 %v433, %v218
    %v1122 = vmul.f32 %v438, %v219
    %v1123 = vmul.f32 %v443, %v220
    %v1124 = vmul.f32 %v448, %v221
    %v1125 = vmul.f32 %v453, %v222
    %v1126 = vmul.f32 %v458, %v223
    %v1127 = vmul.f32 %v463, %v224
    %v1128 = vmul.f32 %v468, %v225
    %v1129 = vmul.f32 %v473, %v226
    %v1130 = vmul.f32 %v478, %v227
    %v1131 = vmul.f32 %v483, %v228
    %v1132 = vadd.f32 %v1100, %v1116
    %v1133 = vadd.f32 %v1101, %v1117
    %v1134 = vadd.f32 %v1102, %v1118
    %v1135 = vadd.f32 %v1103, %v1119
    %v1136 = vadd.f32 %v1104, %v1120
    %v1137 = vadd.f32 %v1105, %v1121
    %v1138 = vadd.f32 %v1106, %v1122
    %v1139 = vadd.f32 %v1107, %v1123
    %v1140 = vadd.f32 %v1108, %v1124
    %v1141 = vadd.f32 %v1109, %v1125
    %v1142 = vadd.f32 %v1110, %v1126
    %v1143 = vadd.f32 %v1111, %v1127
    %v1144 = vadd.f32 %v1112, %v1128
    %v1145 = vadd.f32 %v1113, %v1129
    %v1146 = vadd.f32 %v1114, %v1130
    %v1147 = vadd.f32 %v1115, %v1131
    %v1148 = vmul.f32 %v213, 0.6
    %v1149 = vmul.f32 %v214, 0.6
    %v1150 = vmul.f32 %v215, 0.6
    %v1151 = vmul.f32 %v216, 0.6
    %v1152 = vmul.f32 %v217, 0.6
    %v1153 = vmul.f32 %v218, 0.6
    %v1154 = vmul.f32 %v219, 0.6
    %v1155 = vmul.f32 %v220, 0.6
    %v1156 = vmul.f32 %v221, 0.6
    %v1157 = vmul.f32 %v222, 0.6
    %v1158 = vmul.f32 %v223, 0.6
    %v1159 = vmul.f32 %v224, 0.6
    %v1160 = vmul.f32 %v225, 0.6
    %v1161 = vmul.f32 %v226, 0.6
    %v1162 = vmul.f32 %v227, 0.6
    %v1163 = vmul.f32 %v228, 0.6
    %v1164 = vmul.f32 %v504, %v1132
    %v1165 = vmul.f32 %v509, %v1133
    %v1166 = vmul.f32 %v514, %v1134
    %v1167 = vmul.f32 %v519, %v1135
    %v1168 = vmul.f32 %v524, %v1136
    %v1169 = vmul.f32 %v529, %v1137
    %v1170 = vmul.f32 %v534, %v1138
    %v1171 = vmul.f32 %v539, %v1139
    %v1172 = vmul.f32 %v544, %v1140
    %v1173 = vmul.f32 %v549, %v1141
    %v1174 = vmul.f32 %v554, %v1142
    %v1175 = vmul.f32 %v559, %v1143
    %v1176 = vmul.f32 %v564, %v1144
    %v1177 = vmul.f32 %v569, %v1145
    %v1178 = vmul.f32 %v574, %v1146
    %v1179 = vmul.f32 %v579, %v1147
    %v1180 = vadd.f32 %v1148, %v1164
    %v1181 = vadd.f32 %v1149, %v1165
    %v1182 = vadd.f32 %v1150, %v1166
    %v1183 = vadd.f32 %v1151, %v1167
    %v1184 = vadd.f32 %v1152, %v1168
    %v1185 = vadd.f32 %v1153, %v1169
    %v1186 = vadd.f32 %v1154, %v1170
    %v1187 = vadd.f32 %v1155, %v1171
    %v1188 = vadd.f32 %v1156, %v1172
    %v1189 = vadd.f32 %v1157, %v1173
    %v1190 = vadd.f32 %v1158, %v1174
    %v1191 = vadd.f32 %v1159, %v1175
    %v1192 = vadd.f32 %v1160, %v1176
    %v1193 = vadd.f32 %v1161, %v1177
    %v1194 = vadd.f32 %v1162, %v1178
    %v1195 = vadd.f32 %v1163, %v1179
    %1196 = vmatprep.subr.mxu0 %v230
    %1197 = vmatpush1.msra.mxu0 %v229
    %1198 = vmatprep.subr.mxu0 %v234
    %1199 = vmatpush1.msra.mxu0 %v233
    %1200 = vmatprep.subr.mxu0 %v238
    %1201 = vmatpush1.msra.mxu0 %v237
    %1202 = vmatprep.subr.mxu0 %v242
    %1203 = vmatpush1.msra.mxu0 %v241
    %1204 = vmatprep.subr.mxu0 %v246
    %1205 = vmatpush1.msra.mxu0 %v245
    %1206 = vmatprep.subr.mxu0 %v250
    %1207 = vmatpush1.msra.mxu0 %v249
    %1208 = vmatprep.subr.mxu0 %v254
    %1209 = vmatpush1.msra.mxu0 %v253
    %1210 = vmatprep.subr.mxu0 %v258
    %1211 = vmatpush1.msra.mxu0 %v257
    %1212 = vmatprep.subr.mxu0 %v262
    %1213 = vmatpush1.msra.mxu0 %v261
    %1214 = vmatprep.subr.mxu0 %v266
    %1215 = vmatpush1.msra.mxu0 %v265
    %1216 = vmatprep.subr.mxu0 %v270
    %1217 = vmatpush1.msra.mxu0 %v269
    %1218 = vmatprep.subr.mxu0 %v274
    %1219 = vmatpush1.msra.mxu0 %v273
    %1220 = vmatprep.subr.mxu0 %v278
    %1221 = vmatpush1.msra.mxu0 %v277
    %1222 = vmatprep.subr.mxu0 %v282
    %1223 = vmatpush1.msra.mxu0 %v281
    %1224 = vmatprep.subr.mxu0 %v286
    %1225 = vmatpush1.msra.mxu0 %v285
    %1226 = vmatprep.subr.mxu0 %v290
    %1227 = vmatpush1.msra.mxu0 %v289
    %1228 = vmatprep.subr.mxu0 0.0
    %1229 = vmatpush1.msra.mxu0 0.0
    %1230 = vmatprep.subr.mxu0 0.0
    %1231 = vmatpush1.msra.mxu0 0.0
    %1232 = vmatprep.subr.mxu0 0.0
    %1233 = vmatpush1.msra.mxu0 0.0
    %1234 = vmatprep.subr.mxu0 0.0
    %1235 = vmatpush1.msra.mxu0 0.0
    %1236 = vmatprep.subr.mxu0 0.0
    %1237 = vmatpush1.msra.mxu0 0.0
    %1238 = vmatprep.subr.mxu0 0.0
    %1239 = vmatpush1.msra.mxu0 0.0
    %1240 = vmatprep.subr.mxu0 0.0
    %1241 = vmatpush1.msra.mxu0 0.0
    %1242 = vmatprep.subr.mxu0 0.0
    %1243 = vmatpush1.msra.mxu0 0.0
    %1244 = vmatprep.subr.mxu0 0.0
    %1245 = vmatpush1.msra.mxu0 0.0
    %1246 = vmatprep.subr.mxu0 0.0
    %1247 = vmatpush1.msra.mxu0 0.0
    %1248 = vmatprep.subr.mxu0 0.0
    %1249 = vmatpush1.msra.mxu0 0.0
    %1250 = vmatprep.subr.mxu0 0.0
    %1251 = vmatpush1.msra.mxu0 0.0
    %1252 = vmatprep.subr.mxu0 0.0
    %1253 = vmatpush1.msra.mxu0 0.0
    %1254 = vmatprep.subr.mxu0 0.0
    %1255 = vmatpush1.msra.mxu0 0.0
    %1256 = vmatprep.subr.mxu0 0.0
    %1257 = vmatpush1.msra.mxu0 0.0
    %1258 = vmatprep.subr.mxu0 0.0
    %1259 = vmatpush1.msra.mxu0 0.0
    %1260 = vmatprep.mubr.f32.mxu0 0.0
    %1261 = vmatmul.mubr.f32.gmra.mrb[0].mxu0 %v1180
    %v1262 = vpop.f32.mrb[0].mxu0
    %v1263 = vadd.f32 0.0, %v1262
    %v1264 = vpop.f32.mrb[0].mxu0
    %v1265 = vadd.f32 0.0, %v1264
    %1266 = vmatprep.mubr.f32.mxu0 0.0
    %1267 = vmatmul.mubr.f32.gmra.mrb[0].mxu0 %v1181
    %v1268 = vpop.f32.mrb[0].mxu0
    %v1269 = vadd.f32 0.0, %v1268
    %v1270 = vpop.f32.mrb[0].mxu0
    %v1271 = vadd.f32 0.0, %v1270
    %1272 = vmatprep.mubr.f32.mxu0 0.0
    %1273 = vmatmul.mubr.f32.gmra.mrb[0].mxu0 %v1182
    %v1274 = vpop.f32.mrb[0].mxu0
    %v1275 = vadd.f32 0.0, %v1274
    %v1276 = vpop.f32.mrb[0].mxu0
    %v1277 = vadd.f32 0.0, %v1276
    %1278 = vmatprep.mubr.f32.mxu0 0.0
    %1279 = vmatmul.mubr.f32.gmra.mrb[0].mxu0 %v1183
    %v1280 = vpop.f32.mrb[0].mxu0
    %v1281 = vadd.f32 0.0, %v1280
    %v1282 = vpop.f32.mrb[0].mxu0
    %v1283 = vadd.f32 0.0, %v1282
    %1284 = vmatprep.mubr.f32.mxu0 0.0
    %1285 = vmatmul.mubr.f32.gmra.mrb[0].mxu0 %v1184
    %v1286 = vpop.f32.mrb[0].mxu0
    %v1287 = vadd.f32 0.0, %v1286
    %v1288 = vpop.f32.mrb[0].mxu0
    %v1289 = vadd.f32 0.0, %v1288
    %1290 = vmatprep.mubr.f32.mxu0 0.0
    %1291 = vmatmul.mubr.f32.gmra.mrb[0].mxu0 %v1185
    %v1292 = vpop.f32.mrb[0].mxu0
    %v1293 = vadd.f32 0.0, %v1292
    %v1294 = vpop.f32.mrb[0].mxu0
    %v1295 = vadd.f32 0.0, %v1294
    %1296 = vmatprep.mubr.f32.mxu0 0.0
    %1297 = vmatmul.mubr.f32.gmra.mrb[0].mxu0 %v1186
    %v1298 = vpop.f32.mrb[0].mxu0
    %v1299 = vadd.f32 0.0, %v1298
    %v1300 = vpop.f32.mrb[0].mxu0
    %v1301 = vadd.f32 0.0, %v1300
    %1302 = vmatprep.mubr.f32.mxu0 0.0
    %1303 = vmatmul.mubr.f32.gmra.mrb[0].mxu0 %v1187
    %v1304 = vpop.f32.mrb[0].mxu0
    %v1305 = vadd.f32 0.0, %v1304
    %v1306 = vpop.f32.mrb[0].mxu0
    %v1307 = vadd.f32 0.0, %v1306
    %1308 = vmatprep.mubr.f32.mxu0 0.0
    %1309 = vmatmul.mubr.f32.gmra.mrb[0].mxu0 %v1188
    %v1310 = vpop.f32.mrb[0].mxu0
    %v1311 = vadd.f32 0.0, %v1310
    %v1312 = vpop.f32.mrb[0].mxu0
    %v1313 = vadd.f32 0.0, %v1312
    %1314 = vmatprep.mubr.f32.mxu0 0.0
    %1315 = vmatmul.mubr.f32.gmra.mrb[0].mxu0 %v1189
    %v1316 = vpop.f32.mrb[0].mxu0
    %v1317 = vadd.f32 0.0, %v1316
    %v1318 = vpop.f32.mrb[0].mxu0
    %v1319 = vadd.f32 0.0, %v1318
    %1320 = vmatprep.mubr.f32.mxu0 0.0
    %1321 = vmatmul.mubr.f32.gmra.mrb[0].mxu0 %v1190
    %v1322 = vpop.f32.mrb[0].mxu0
    %v1323 = vadd.f32 0.0, %v1322
    %v1324 = vpop.f32.mrb[0].mxu0
    %v1325 = vadd.f32 0.0, %v1324
    %1326 = vmatprep.mubr.f32.mxu0 0.0
    %1327 = vmatmul.mubr.f32.gmra.mrb[0].mxu0 %v1191
    %v1328 = vpop.f32.mrb[0].mxu0
    %v1329 = vadd.f32 0.0, %v1328
    %v1330 = vpop.f32.mrb[0].mxu0
    %v1331 = vadd.f32 0.0, %v1330
    %1332 = vmatprep.mubr.f32.mxu0 0.0
    %1333 = vmatmul.mubr.f32.gmra.mrb[0].mxu0 %v1192
    %v1334 = vpop.f32.mrb[0].mxu0
    %v1335 = vadd.f32 0.0, %v1334
    %v1336 = vpop.f32.mrb[0].mxu0
    %v1337 = vadd.f32 0.0, %v1336
    %1338 = vmatprep.mubr.f32.mxu0 0.0
    %1339 = vmatmul.mubr.f32.gmra.mrb[0].mxu0 %v1193
    %v1340 = vpop.f32.mrb[0].mxu0
    %v1341 = vadd.f32 0.0, %v1340
    %v1342 = vpop.f32.mrb[0].mxu0
    %v1343 = vadd.f32 0.0, %v1342
    %1344 = vmatprep.mubr.f32.mxu0 0.0
    %1345 = vmatmul.mubr.f32.gmra.mrb[0].mxu0 %v1194
    %v1346 = vpop.f32.mrb[0].mxu0
    %v1347 = vadd.f32 0.0, %v1346
    %v1348 = vpop.f32.mrb[0].mxu0
    %v1349 = vadd.f32 0.0, %v1348
    %1350 = vmatprep.mubr.f32.mxu0 0.0
    %1351 = vmatmul.mubr.f32.gmra.mrb[0].mxu0 %v1195
    %v1352 = vpop.f32.mrb[0].mxu0
    %v1353 = vadd.f32 0.0, %v1352
    %v1354 = vpop.f32.mrb[0].mxu0
    %v1355 = vadd.f32 0.0, %v1354
    %1356 = vdwg.mxu0
    %1357 = vmatprep.subr.mxu0 %v232
    %1358 = vmatpush1.msra.mxu0 %v231
    %1359 = vmatprep.subr.mxu0 %v236
    %1360 = vmatpush1.msra.mxu0 %v235
    %1361 = vmatprep.subr.mxu0 %v240
    %1362 = vmatpush1.msra.mxu0 %v239
    %1363 = vmatprep.subr.mxu0 %v244
    %1364 = vmatpush1.msra.mxu0 %v243
    %1365 = vmatprep.subr.mxu0 %v248
    %1366 = vmatpush1.msra.mxu0 %v247
    %1367 = vmatprep.subr.mxu0 %v252
    %1368 = vmatpush1.msra.mxu0 %v251
    %1369 = vmatprep.subr.mxu0 %v256
    %1370 = vmatpush1.msra.mxu0 %v255
    %1371 = vmatprep.subr.mxu0 %v260
    %1372 = vmatpush1.msra.mxu0 %v259
    %1373 = vmatprep.subr.mxu0 %v264
    %1374 = vmatpush1.msra.mxu0 %v263
    %1375 = vmatprep.subr.mxu0 %v268
    %1376 = vmatpush1.msra.mxu0 %v267
    %1377 = vmatprep.subr.mxu0 %v272
    %1378 = vmatpush1.msra.mxu0 %v271
    %1379 = vmatprep.subr.mxu0 %v276
    %1380 = vmatpush1.msra.mxu0 %v275
    %1381 = vmatprep.subr.mxu0 %v280
    %1382 = vmatpush1.msra.mxu0 %v279
    %1383 = vmatprep.subr.mxu0 %v284
    %1384 = vmatpush1.msra.mxu0 %v283
    %1385 = vmatprep.subr.mxu0 %v288
    %1386 = vmatpush1.msra.mxu0 %v287
    %1387 = vmatprep.subr.mxu0 %v292
    %1388 = vmatpush1.msra.mxu0 %v291
    %1389 = vmatprep.subr.mxu0 0.0
    %1390 = vmatpush1.msra.mxu0 0.0
    %1391 = vmatprep.subr.mxu0 0.0
    %1392 = vmatpush1.msra.mxu0 0.0
    %1393 = vmatprep.subr.mxu0 0.0
    %1394 = vmatpush1.msra.mxu0 0.0
    %1395 = vmatprep.subr.mxu0 0.0
    %1396 = vmatpush1.msra.mxu0 0.0
    %1397 = vmatprep.subr.mxu0 0.0
    %1398 = vmatpush1.msra.mxu0 0.0
    %1399 = vmatprep.subr.mxu0 0.0
    %1400 = vmatpush1.msra.mxu0 0.0
    %1401 = vmatprep.subr.mxu0 0.0
    %1402 = vmatpush1.msra.mxu0 0.0
    %1403 = vmatprep.subr.mxu0 0.0
    %1404 = vmatpush1.msra.mxu0 0.0
    %1405 = vmatprep.subr.mxu0 0.0
    %1406 = vmatpush1.msra.mxu0 0.0
    %1407 = vmatprep.subr.mxu0 0.0
    %1408 = vmatpush1.msra.mxu0 0.0
    %1409 = vmatprep.subr.mxu0 0.0
    %1410 = vmatpush1.msra.mxu0 0.0
    %1411 = vmatprep.subr.mxu0 0.0
    %1412 = vmatpush1.msra.mxu0 0.0
    %1413 = vmatprep.subr.mxu0 0.0
    %1414 = vmatpush1.msra.mxu0 0.0
    %1415 = vmatprep.subr.mxu0 0.0
    %1416 = vmatpush1.msra.mxu0 0.0
    %1417 = vmatprep.subr.mxu0 0.0
    %1418 = vmatpush1.msra.mxu0 0.0
    %1419 = vmatprep.subr.mxu0 0.0
    %1420 = vmatpush1.msra.mxu0 0.0
    %1421 = vmatprep.mubr.f32.mxu0 0.0
    %1422 = vmatmul.mubr.f32.gmra.mrb[0].mxu0 %v1180
    %v1423 = vpop.f32.mrb[0].mxu0
    %v1424 = vadd.f32 0.0, %v1423
    %v1425 = vpop.f32.mrb[0].mxu0
    %v1426 = vadd.f32 0.0, %v1425
    %1427 = vmatprep.mubr.f32.mxu0 0.0
    %1428 = vmatmul.mubr.f32.gmra.mrb[0].mxu0 %v1181
    %v1429 = vpop.f32.mrb[0].mxu0
    %v1430 = vadd.f32 0.0, %v1429
    %v1431 = vpop.f32.mrb[0].mxu0
    %v1432 = vadd.f32 0.0, %v1431
    %1433 = vmatprep.mubr.f32.mxu0 0.0
    %1434 = vmatmul.mubr.f32.gmra.mrb[0].mxu0 %v1182
    %v1435 = vpop.f32.mrb[0].mxu0
    %v1436 = vadd.f32 0.0, %v1435
    %v1437 = vpop.f32.mrb[0].mxu0
    %v1438 = vadd.f32 0.0, %v1437
    %1439 = vmatprep.mubr.f32.mxu0 0.0
    %1440 = vmatmul.mubr.f32.gmra.mrb[0].mxu0 %v1183
    %v1441 = vpop.f32.mrb[0].mxu0
    %v1442 = vadd.f32 0.0, %v1441
    %v1443 = vpop.f32.mrb[0].mxu0
    %v1444 = vadd.f32 0.0, %v1443
    %1445 = vmatprep.mubr.f32.mxu0 0.0
    %1446 = vmatmul.mubr.f32.gmra.mrb[0].mxu0 %v1184
    %v1447 = vpop.f32.mrb[0].mxu0
    %v1448 = vadd.f32 0.0, %v1447
    %v1449 = vpop.f32.mrb[0].mxu0
    %v1450 = vadd.f32 0.0, %v1449
    %1451 = vmatprep.mubr.f32.mxu0 0.0
    %1452 = vmatmul.mubr.f32.gmra.mrb[0].mxu0 %v1185
    %v1453 = vpop.f32.mrb[0].mxu0
    %v1454 = vadd.f32 0.0, %v1453
    %v1455 = vpop.f32.mrb[0].mxu0
    %v1456 = vadd.f32 0.0, %v1455
    %1457 = vmatprep.mubr.f32.mxu0 0.0
    %1458 = vmatmul.mubr.f32.gmra.mrb[0].mxu0 %v1186
    %v1459 = vpop.f32.mrb[0].mxu0
    %v1460 = vadd.f32 0.0, %v1459
    %v1461 = vpop.f32.mrb[0].mxu0
    %v1462 = vadd.f32 0.0, %v1461
    %1463 = vmatprep.mubr.f32.mxu0 0.0
    %1464 = vmatmul.mubr.f32.gmra.mrb[0].mxu0 %v1187
    %v1465 = vpop.f32.mrb[0].mxu0
    %v1466 = vadd.f32 0.0, %v1465
    %v1467 = vpop.f32.mrb[0].mxu0
    %v1468 = vadd.f32 0.0, %v1467
    %1469 = vmatprep.mubr.f32.mxu0 0.0
    %1470 = vmatmul.mubr.f32.gmra.mrb[0].mxu0 %v1188
    %v1471 = vpop.f32.mrb[0].mxu0
    %v1472 = vadd.f32 0.0, %v1471
    %v1473 = vpop.f32.mrb[0].mxu0
    %v1474 = vadd.f32 0.0, %v1473
    %1475 = vmatprep.mubr.f32.mxu0 0.0
    %1476 = vmatmul.mubr.f32.gmra.mrb[0].mxu0 %v1189
    %v1477 = vpop.f32.mrb[0].mxu0
    %v1478 = vadd.f32 0.0, %v1477
    %v1479 = vpop.f32.mrb[0].mxu0
    %v1480 = vadd.f32 0.0, %v1479
    %1481 = vmatprep.mubr.f32.mxu0 0.0
    %1482 = vmatmul.mubr.f32.gmra.mrb[0].mxu0 %v1190
    %v1483 = vpop.f32.mrb[0].mxu0
    %v1484 = vadd.f32 0.0, %v1483
    %v1485 = vpop.f32.mrb[0].mxu0
    %v1486 = vadd.f32 0.0, %v1485
    %1487 = vmatprep.mubr.f32.mxu0 0.0
    %1488 = vmatmul.mubr.f32.gmra.mrb[0].mxu0 %v1191
    %v1489 = vpop.f32.mrb[0].mxu0
    %v1490 = vadd.f32 0.0, %v1489
    %v1491 = vpop.f32.mrb[0].mxu0
    %v1492 = vadd.f32 0.0, %v1491
    %1493 = vmatprep.mubr.f32.mxu0 0.0
    %1494 = vmatmul.mubr.f32.gmra.mrb[0].mxu0 %v1192
    %v1495 = vpop.f32.mrb[0].mxu0
    %v1496 = vadd.f32 0.0, %v1495
    %v1497 = vpop.f32.mrb[0].mxu0
    %v1498 = vadd.f32 0.0, %v1497
    %1499 = vmatprep.mubr.f32.mxu0 0.0
    %1500 = vmatmul.mubr.f32.gmra.mrb[0].mxu0 %v1193
    %v1501 = vpop.f32.mrb[0].mxu0
    %v1502 = vadd.f32 0.0, %v1501
    %v1503 = vpop.f32.mrb[0].mxu0
    %v1504 = vadd.f32 0.0, %v1503
    %1505 = vmatprep.mubr.f32.mxu0 0.0
    %1506 = vmatmul.mubr.f32.gmra.mrb[0].mxu0 %v1194
    %v1507 = vpop.f32.mrb[0].mxu0
    %v1508 = vadd.f32 0.0, %v1507
    %v1509 = vpop.f32.mrb[0].mxu0
    %v1510 = vadd.f32 0.0, %v1509
    %1511 = vmatprep.mubr.f32.mxu0 0.0
    %1512 = vmatmul.mubr.f32.gmra.mrb[0].mxu0 %v1195
    %v1513 = vpop.f32.mrb[0].mxu0
    %v1514 = vadd.f32 0.0, %v1513
    %v1515 = vpop.f32.mrb[0].mxu0
    %v1516 = vadd.f32 0.0, %v1515
    %1517 = vdwg.mxu0
    %v1518 = vpack.c.bf16 %v1269, %v1263
    %v1519 = vpack.c.bf16 %v1281, %v1275
    %v1520 = vpack.c.bf16 %v1293, %v1287
    %v1521 = vpack.c.bf16 %v1305, %v1299
    %v1522 = vpack.c.bf16 %v1317, %v1311
    %v1523 = vpack.c.bf16 %v1329, %v1323
    %v1524 = vpack.c.bf16 %v1341, %v1335
    %v1525 = vpack.c.bf16 %v1353, %v1347
    %v1526 = vpack.c.bf16 %v1271, %v1265
    %v1527 = vpack.c.bf16 %v1283, %v1277
    %v1528 = vpack.c.bf16 %v1295, %v1289
    %v1529 = vpack.c.bf16 %v1307, %v1301
    %v1530 = vpack.c.bf16 %v1319, %v1313
    %v1531 = vpack.c.bf16 %v1331, %v1325
    %v1532 = vpack.c.bf16 %v1343, %v1337
    %v1533 = vpack.c.bf16 %v1355, %v1349
    %1534 = vmatprep.subr.bf16.mxu0 0
    %1535 = vmatpush1.bf16.msra.mxu0 %v1518
    %1536 = vmatprep.subr.bf16.mxu0 0
    %1537 = vmatpush1.bf16.msra.mxu0 %v1519
    %1538 = vmatprep.subr.bf16.mxu0 0
    %1539 = vmatpush1.bf16.msra.mxu0 %v1520
    %1540 = vmatprep.subr.bf16.mxu0 0
    %1541 = vmatpush1.bf16.msra.mxu0 %v1521
    %1542 = vmatprep.subr.bf16.mxu0 0
    %1543 = vmatpush1.bf16.msra.mxu0 %v1522
    %1544 = vmatprep.subr.bf16.mxu0 0
    %1545 = vmatpush1.bf16.msra.mxu0 %v1523
    %1546 = vmatprep.subr.bf16.mxu0 0
    %1547 = vmatpush1.bf16.msra.mxu0 %v1524
    %1548 = vmatprep.subr.bf16.mxu0 0
    %1549 = vmatpush1.bf16.msra.mxu0 %v1525
    %1550 = vmatprep.subr.bf16.mxu0 0
    %1551 = vmatpush1.bf16.msra.mxu0 %v1526
    %1552 = vmatprep.subr.bf16.mxu0 0
    %1553 = vmatpush1.bf16.msra.mxu0 %v1527
    %1554 = vmatprep.subr.bf16.mxu0 0
    %1555 = vmatpush1.bf16.msra.mxu0 %v1528
    %1556 = vmatprep.subr.bf16.mxu0 0
    %1557 = vmatpush1.bf16.msra.mxu0 %v1529
    %1558 = vmatprep.subr.bf16.mxu0 0
    %1559 = vmatpush1.bf16.msra.mxu0 %v1530
    %1560 = vmatprep.subr.bf16.mxu0 0
    %1561 = vmatpush1.bf16.msra.mxu0 %v1531
    %1562 = vmatprep.subr.bf16.mxu0 0
    %1563 = vmatpush1.bf16.msra.mxu0 %v1532
    %1564 = vmatprep.subr.bf16.mxu0 0
    %1565 = vmatpush1.bf16.msra.mxu0 %v1533
    %1566 = vmatprep.mubr.bf16.mxu0 %v924
    %1567 = vmatmul.mubr.bf16.gmra.mrb[0].mxu0 %v923
    %v1568 = vpop.f32.mrb[0].mxu0
    %v1569 = vadd.f32 0.0, %v1568
    %v1570 = vpop.f32.mrb[0].mxu0
    %v1571 = vpop.f32.mrb[0].mxu0
    %v1572 = vadd.f32 0.0, %v1571
    %v1573 = vpop.f32.mrb[0].mxu0
    %1574 = vmatprep.mubr.bf16.mxu0 %v926
    %1575 = vmatmul.mubr.bf16.gmra.mrb[0].mxu0 %v925
    %v1576 = vpop.f32.mrb[0].mxu0
    %v1577 = vadd.f32 0.0, %v1576
    %v1578 = vpop.f32.mrb[0].mxu0
    %v1579 = vpop.f32.mrb[0].mxu0
    %v1580 = vadd.f32 0.0, %v1579
    %v1581 = vpop.f32.mrb[0].mxu0
    %1582 = vmatprep.mubr.bf16.mxu0 %v928
    %1583 = vmatmul.mubr.bf16.gmra.mrb[0].mxu0 %v927
    %v1584 = vpop.f32.mrb[0].mxu0
    %v1585 = vadd.f32 0.0, %v1584
    %v1586 = vpop.f32.mrb[0].mxu0
    %v1587 = vpop.f32.mrb[0].mxu0
    %v1588 = vadd.f32 0.0, %v1587
    %v1589 = vpop.f32.mrb[0].mxu0
    %1590 = vmatprep.mubr.bf16.mxu0 %v930
    %1591 = vmatmul.mubr.bf16.gmra.mrb[0].mxu0 %v929
    %v1592 = vpop.f32.mrb[0].mxu0
    %v1593 = vadd.f32 0.0, %v1592
    %v1594 = vpop.f32.mrb[0].mxu0
    %v1595 = vpop.f32.mrb[0].mxu0
    %v1596 = vadd.f32 0.0, %v1595
    %v1597 = vpop.f32.mrb[0].mxu0
    %1598 = vmatprep.mubr.bf16.mxu0 %v932
    %1599 = vmatmul.mubr.bf16.gmra.mrb[0].mxu0 %v931
    %v1600 = vpop.f32.mrb[0].mxu0
    %v1601 = vadd.f32 0.0, %v1600
    %v1602 = vpop.f32.mrb[0].mxu0
    %v1603 = vpop.f32.mrb[0].mxu0
    %v1604 = vadd.f32 0.0, %v1603
    %v1605 = vpop.f32.mrb[0].mxu0
    %1606 = vmatprep.mubr.bf16.mxu0 %v934
    %1607 = vmatmul.mubr.bf16.gmra.mrb[0].mxu0 %v933
    %v1608 = vpop.f32.mrb[0].mxu0
    %v1609 = vadd.f32 0.0, %v1608
    %v1610 = vpop.f32.mrb[0].mxu0
    %v1611 = vpop.f32.mrb[0].mxu0
    %v1612 = vadd.f32 0.0, %v1611
    %v1613 = vpop.f32.mrb[0].mxu0
    %1614 = vmatprep.mubr.bf16.mxu0 %v936
    %1615 = vmatmul.mubr.bf16.gmra.mrb[0].mxu0 %v935
    %v1616 = vpop.f32.mrb[0].mxu0
    %v1617 = vadd.f32 0.0, %v1616
    %v1618 = vpop.f32.mrb[0].mxu0
    %v1619 = vpop.f32.mrb[0].mxu0
    %v1620 = vadd.f32 0.0, %v1619
    %v1621 = vpop.f32.mrb[0].mxu0
    %1622 = vmatprep.mubr.bf16.mxu0 %v938
    %1623 = vmatmul.mubr.bf16.gmra.mrb[0].mxu0 %v937
    %v1624 = vpop.f32.mrb[0].mxu0
    %v1625 = vadd.f32 0.0, %v1624
    %v1626 = vpop.f32.mrb[0].mxu0
    %v1627 = vpop.f32.mrb[0].mxu0
    %v1628 = vadd.f32 0.0, %v1627
    %v1629 = vpop.f32.mrb[0].mxu0
    %1630 = vdwg.mxu0
    %v1631 = vmul.f32 %v312, %v1424
    %v1632 = vmul.f32 %v317, %v1430
    %v1633 = vmul.f32 %v322, %v1436
    %v1634 = vmul.f32 %v327, %v1442
    %v1635 = vmul.f32 %v332, %v1448
    %v1636 = vmul.f32 %v337, %v1454
    %v1637 = vmul.f32 %v342, %v1460
    %v1638 = vmul.f32 %v347, %v1466
    %v1639 = vmul.f32 %v352, %v1472
    %v1640 = vmul.f32 %v357, %v1478
    %v1641 = vmul.f32 %v362, %v1484
    %v1642 = vmul.f32 %v367, %v1490
    %v1643 = vmul.f32 %v372, %v1496
    %v1644 = vmul.f32 %v377, %v1502
    %v1645 = vmul.f32 %v382, %v1508
    %v1646 = vmul.f32 %v387, %v1514
    %v1647 = vsub.f32 %v1569, %v1631
    %v1648 = vsub.f32 %v1572, %v1632
    %v1649 = vsub.f32 %v1577, %v1633
    %v1650 = vsub.f32 %v1580, %v1634
    %v1651 = vsub.f32 %v1585, %v1635
    %v1652 = vsub.f32 %v1588, %v1636
    %v1653 = vsub.f32 %v1593, %v1637
    %v1654 = vsub.f32 %v1596, %v1638
    %v1655 = vsub.f32 %v1601, %v1639
    %v1656 = vsub.f32 %v1604, %v1640
    %v1657 = vsub.f32 %v1609, %v1641
    %v1658 = vsub.f32 %v1612, %v1642
    %v1659 = vsub.f32 %v1617, %v1643
    %v1660 = vsub.f32 %v1620, %v1644
    %v1661 = vsub.f32 %v1625, %v1645
    %v1662 = vsub.f32 %v1628, %v1646
    %v1663 = vmul.f32 %v408, %v1426
    %v1664 = vmul.f32 %v413, %v1432
    %v1665 = vmul.f32 %v418, %v1438
    %v1666 = vmul.f32 %v423, %v1444
    %v1667 = vmul.f32 %v428, %v1450
    %v1668 = vmul.f32 %v433, %v1456
    %v1669 = vmul.f32 %v438, %v1462
    %v1670 = vmul.f32 %v443, %v1468
    %v1671 = vmul.f32 %v448, %v1474
    %v1672 = vmul.f32 %v453, %v1480
    %v1673 = vmul.f32 %v458, %v1486
    %v1674 = vmul.f32 %v463, %v1492
    %v1675 = vmul.f32 %v468, %v1498
    %v1676 = vmul.f32 %v473, %v1504
    %v1677 = vmul.f32 %v478, %v1510
    %v1678 = vmul.f32 %v483, %v1516
    %v1679 = vsub.f32 %v1647, %v1663
    %v1680 = vsub.f32 %v1648, %v1664
    %v1681 = vsub.f32 %v1649, %v1665
    %v1682 = vsub.f32 %v1650, %v1666
    %v1683 = vsub.f32 %v1651, %v1667
    %v1684 = vsub.f32 %v1652, %v1668
    %v1685 = vsub.f32 %v1653, %v1669
    %v1686 = vsub.f32 %v1654, %v1670
    %v1687 = vsub.f32 %v1655, %v1671
    %v1688 = vsub.f32 %v1656, %v1672
    %v1689 = vsub.f32 %v1657, %v1673
    %v1690 = vsub.f32 %v1658, %v1674
    %v1691 = vsub.f32 %v1659, %v1675
    %v1692 = vsub.f32 %v1660, %v1676
    %v1693 = vsub.f32 %v1661, %v1677
    %v1694 = vsub.f32 %v1662, %v1678
    %v1695 = vadd.f32 %v1679, %v213
    %v1696 = vadd.f32 %v1680, %v214
    %v1697 = vadd.f32 %v1681, %v215
    %v1698 = vadd.f32 %v1682, %v216
    %v1699 = vadd.f32 %v1683, %v217
    %v1700 = vadd.f32 %v1684, %v218
    %v1701 = vadd.f32 %v1685, %v219
    %v1702 = vadd.f32 %v1686, %v220
    %v1703 = vadd.f32 %v1687, %v221
    %v1704 = vadd.f32 %v1688, %v222
    %v1705 = vadd.f32 %v1689, %v223
    %v1706 = vadd.f32 %v1690, %v224
    %v1707 = vadd.f32 %v1691, %v225
    %v1708 = vadd.f32 %v1692, %v226
    %v1709 = vadd.f32 %v1693, %v227
    %v1710 = vadd.f32 %v1694, %v228
    %v1711 = vmul.f32 %v408, %v1180
    %v1712 = vmul.f32 %v413, %v1181
    %v1713 = vmul.f32 %v418, %v1182
    %v1714 = vmul.f32 %v423, %v1183
    %v1715 = vmul.f32 %v428, %v1184
    %v1716 = vmul.f32 %v433, %v1185
    %v1717 = vmul.f32 %v438, %v1186
    %v1718 = vmul.f32 %v443, %v1187
    %v1719 = vmul.f32 %v448, %v1188
    %v1720 = vmul.f32 %v453, %v1189
    %v1721 = vmul.f32 %v458, %v1190
    %v1722 = vmul.f32 %v463, %v1191
    %v1723 = vmul.f32 %v468, %v1192
    %v1724 = vmul.f32 %v473, %v1193
    %v1725 = vmul.f32 %v478, %v1194
    %v1726 = vmul.f32 %v483, %v1195
    %v1727 = vadd.f32 %v1695, %v1711
    %v1728 = vadd.f32 %v1696, %v1712
    %v1729 = vadd.f32 %v1697, %v1713
    %v1730 = vadd.f32 %v1698, %v1714
    %v1731 = vadd.f32 %v1699, %v1715
    %v1732 = vadd.f32 %v1700, %v1716
    %v1733 = vadd.f32 %v1701, %v1717
    %v1734 = vadd.f32 %v1702, %v1718
    %v1735 = vadd.f32 %v1703, %v1719
    %v1736 = vadd.f32 %v1704, %v1720
    %v1737 = vadd.f32 %v1705, %v1721
    %v1738 = vadd.f32 %v1706, %v1722
    %v1739 = vadd.f32 %v1707, %v1723
    %v1740 = vadd.f32 %v1708, %v1724
    %v1741 = vadd.f32 %v1709, %v1725
    %v1742 = vadd.f32 %v1710, %v1726
    %v1743 = vmul.f32 %v1180, 0.6
    %v1744 = vmul.f32 %v1181, 0.6
    %v1745 = vmul.f32 %v1182, 0.6
    %v1746 = vmul.f32 %v1183, 0.6
    %v1747 = vmul.f32 %v1184, 0.6
    %v1748 = vmul.f32 %v1185, 0.6
    %v1749 = vmul.f32 %v1186, 0.6
    %v1750 = vmul.f32 %v1187, 0.6
    %v1751 = vmul.f32 %v1188, 0.6
    %v1752 = vmul.f32 %v1189, 0.6
    %v1753 = vmul.f32 %v1190, 0.6
    %v1754 = vmul.f32 %v1191, 0.6
    %v1755 = vmul.f32 %v1192, 0.6
    %v1756 = vmul.f32 %v1193, 0.6
    %v1757 = vmul.f32 %v1194, 0.6
    %v1758 = vmul.f32 %v1195, 0.6
    %v1759 = vmul.f32 %v504, %v1727
    %v1760 = vmul.f32 %v509, %v1728
    %v1761 = vmul.f32 %v514, %v1729
    %v1762 = vmul.f32 %v519, %v1730
    %v1763 = vmul.f32 %v524, %v1731
    %v1764 = vmul.f32 %v529, %v1732
    %v1765 = vmul.f32 %v534, %v1733
    %v1766 = vmul.f32 %v539, %v1734
    %v1767 = vmul.f32 %v544, %v1735
    %v1768 = vmul.f32 %v549, %v1736
    %v1769 = vmul.f32 %v554, %v1737
    %v1770 = vmul.f32 %v559, %v1738
    %v1771 = vmul.f32 %v564, %v1739
    %v1772 = vmul.f32 %v569, %v1740
    %v1773 = vmul.f32 %v574, %v1741
    %v1774 = vmul.f32 %v579, %v1742
    %v1775 = vadd.f32 %v1743, %v1759
    %v1776 = vadd.f32 %v1744, %v1760
    %v1777 = vadd.f32 %v1745, %v1761
    %v1778 = vadd.f32 %v1746, %v1762
    %v1779 = vadd.f32 %v1747, %v1763
    %v1780 = vadd.f32 %v1748, %v1764
    %v1781 = vadd.f32 %v1749, %v1765
    %v1782 = vadd.f32 %v1750, %v1766
    %v1783 = vadd.f32 %v1751, %v1767
    %v1784 = vadd.f32 %v1752, %v1768
    %v1785 = vadd.f32 %v1753, %v1769
    %v1786 = vadd.f32 %v1754, %v1770
    %v1787 = vadd.f32 %v1755, %v1771
    %v1788 = vadd.f32 %v1756, %v1772
    %v1789 = vadd.f32 %v1757, %v1773
    %v1790 = vadd.f32 %v1758, %v1774
    %1791 = vmatprep.subr.mxu0 %v230
    %1792 = vmatpush1.msra.mxu0 %v229
    %1793 = vmatprep.subr.mxu0 %v234
    %1794 = vmatpush1.msra.mxu0 %v233
    %1795 = vmatprep.subr.mxu0 %v238
    %1796 = vmatpush1.msra.mxu0 %v237
    %1797 = vmatprep.subr.mxu0 %v242
    %1798 = vmatpush1.msra.mxu0 %v241
    %1799 = vmatprep.subr.mxu0 %v246
    %1800 = vmatpush1.msra.mxu0 %v245
    %1801 = vmatprep.subr.mxu0 %v250
    %1802 = vmatpush1.msra.mxu0 %v249
    %1803 = vmatprep.subr.mxu0 %v254
    %1804 = vmatpush1.msra.mxu0 %v253
    %1805 = vmatprep.subr.mxu0 %v258
    %1806 = vmatpush1.msra.mxu0 %v257
    %1807 = vmatprep.subr.mxu0 %v262
    %1808 = vmatpush1.msra.mxu0 %v261
    %1809 = vmatprep.subr.mxu0 %v266
    %1810 = vmatpush1.msra.mxu0 %v265
    %1811 = vmatprep.subr.mxu0 %v270
    %1812 = vmatpush1.msra.mxu0 %v269
    %1813 = vmatprep.subr.mxu0 %v274
    %1814 = vmatpush1.msra.mxu0 %v273
    %1815 = vmatprep.subr.mxu0 %v278
    %1816 = vmatpush1.msra.mxu0 %v277
    %1817 = vmatprep.subr.mxu0 %v282
    %1818 = vmatpush1.msra.mxu0 %v281
    %1819 = vmatprep.subr.mxu0 %v286
    %1820 = vmatpush1.msra.mxu0 %v285
    %1821 = vmatprep.subr.mxu0 %v290
    %1822 = vmatpush1.msra.mxu0 %v289
    %1823 = vmatprep.subr.mxu0 0.0
    %1824 = vmatpush1.msra.mxu0 0.0
    %1825 = vmatprep.subr.mxu0 0.0
    %1826 = vmatpush1.msra.mxu0 0.0
    %1827 = vmatprep.subr.mxu0 0.0
    %1828 = vmatpush1.msra.mxu0 0.0
    %1829 = vmatprep.subr.mxu0 0.0
    %1830 = vmatpush1.msra.mxu0 0.0
    %1831 = vmatprep.subr.mxu0 0.0
    %1832 = vmatpush1.msra.mxu0 0.0
    %1833 = vmatprep.subr.mxu0 0.0
    %1834 = vmatpush1.msra.mxu0 0.0
    %1835 = vmatprep.subr.mxu0 0.0
    %1836 = vmatpush1.msra.mxu0 0.0
    %1837 = vmatprep.subr.mxu0 0.0
    %1838 = vmatpush1.msra.mxu0 0.0
    %1839 = vmatprep.subr.mxu0 0.0
    %1840 = vmatpush1.msra.mxu0 0.0
    %1841 = vmatprep.subr.mxu0 0.0
    %1842 = vmatpush1.msra.mxu0 0.0
    %1843 = vmatprep.subr.mxu0 0.0
    %1844 = vmatpush1.msra.mxu0 0.0
    %1845 = vmatprep.subr.mxu0 0.0
    %1846 = vmatpush1.msra.mxu0 0.0
    %1847 = vmatprep.subr.mxu0 0.0
    %1848 = vmatpush1.msra.mxu0 0.0
    %1849 = vmatprep.subr.mxu0 0.0
    %1850 = vmatpush1.msra.mxu0 0.0
    %1851 = vmatprep.subr.mxu0 0.0
    %1852 = vmatpush1.msra.mxu0 0.0
    %1853 = vmatprep.subr.mxu0 0.0
    %1854 = vmatpush1.msra.mxu0 0.0
    %1855 = vmatprep.mubr.f32.mxu0 0.0
    %1856 = vmatmul.mubr.f32.gmra.mrb[0].mxu0 %v1775
    %v1857 = vpop.f32.mrb[0].mxu0
    %v1858 = vadd.f32 0.0, %v1857
    %v1859 = vpop.f32.mrb[0].mxu0
    %v1860 = vadd.f32 0.0, %v1859
    %1861 = vmatprep.mubr.f32.mxu0 0.0
    %1862 = vmatmul.mubr.f32.gmra.mrb[0].mxu0 %v1776
    %v1863 = vpop.f32.mrb[0].mxu0
    %v1864 = vadd.f32 0.0, %v1863
    %v1865 = vpop.f32.mrb[0].mxu0
    %v1866 = vadd.f32 0.0, %v1865
    %1867 = vmatprep.mubr.f32.mxu0 0.0
    %1868 = vmatmul.mubr.f32.gmra.mrb[0].mxu0 %v1777
    %v1869 = vpop.f32.mrb[0].mxu0
    %v1870 = vadd.f32 0.0, %v1869
    %v1871 = vpop.f32.mrb[0].mxu0
    %v1872 = vadd.f32 0.0, %v1871
    %1873 = vmatprep.mubr.f32.mxu0 0.0
    %1874 = vmatmul.mubr.f32.gmra.mrb[0].mxu0 %v1778
    %v1875 = vpop.f32.mrb[0].mxu0
    %v1876 = vadd.f32 0.0, %v1875
    %v1877 = vpop.f32.mrb[0].mxu0
    %v1878 = vadd.f32 0.0, %v1877
    %1879 = vmatprep.mubr.f32.mxu0 0.0
    %1880 = vmatmul.mubr.f32.gmra.mrb[0].mxu0 %v1779
    %v1881 = vpop.f32.mrb[0].mxu0
    %v1882 = vadd.f32 0.0, %v1881
    %v1883 = vpop.f32.mrb[0].mxu0
    %v1884 = vadd.f32 0.0, %v1883
    %1885 = vmatprep.mubr.f32.mxu0 0.0
    %1886 = vmatmul.mubr.f32.gmra.mrb[0].mxu0 %v1780
    %v1887 = vpop.f32.mrb[0].mxu0
    %v1888 = vadd.f32 0.0, %v1887
    %v1889 = vpop.f32.mrb[0].mxu0
    %v1890 = vadd.f32 0.0, %v1889
    %1891 = vmatprep.mubr.f32.mxu0 0.0
    %1892 = vmatmul.mubr.f32.gmra.mrb[0].mxu0 %v1781
    %v1893 = vpop.f32.mrb[0].mxu0
    %v1894 = vadd.f32 0.0, %v1893
    %v1895 = vpop.f32.mrb[0].mxu0
    %v1896 = vadd.f32 0.0, %v1895
    %1897 = vmatprep.mubr.f32.mxu0 0.0
    %1898 = vmatmul.mubr.f32.gmra.mrb[0].mxu0 %v1782
    %v1899 = vpop.f32.mrb[0].mxu0
    %v1900 = vadd.f32 0.0, %v1899
    %v1901 = vpop.f32.mrb[0].mxu0
    %v1902 = vadd.f32 0.0, %v1901
    %1903 = vmatprep.mubr.f32.mxu0 0.0
    %1904 = vmatmul.mubr.f32.gmra.mrb[0].mxu0 %v1783
    %v1905 = vpop.f32.mrb[0].mxu0
    %v1906 = vadd.f32 0.0, %v1905
    %v1907 = vpop.f32.mrb[0].mxu0
    %v1908 = vadd.f32 0.0, %v1907
    %1909 = vmatprep.mubr.f32.mxu0 0.0
    %1910 = vmatmul.mubr.f32.gmra.mrb[0].mxu0 %v1784
    %v1911 = vpop.f32.mrb[0].mxu0
    %v1912 = vadd.f32 0.0, %v1911
    %v1913 = vpop.f32.mrb[0].mxu0
    %v1914 = vadd.f32 0.0, %v1913
    %1915 = vmatprep.mubr.f32.mxu0 0.0
    %1916 = vmatmul.mubr.f32.gmra.mrb[0].mxu0 %v1785
    %v1917 = vpop.f32.mrb[0].mxu0
    %v1918 = vadd.f32 0.0, %v1917
    %v1919 = vpop.f32.mrb[0].mxu0
    %v1920 = vadd.f32 0.0, %v1919
    %1921 = vmatprep.mubr.f32.mxu0 0.0
    %1922 = vmatmul.mubr.f32.gmra.mrb[0].mxu0 %v1786
    %v1923 = vpop.f32.mrb[0].mxu0
    %v1924 = vadd.f32 0.0, %v1923
    %v1925 = vpop.f32.mrb[0].mxu0
    %v1926 = vadd.f32 0.0, %v1925
    %1927 = vmatprep.mubr.f32.mxu0 0.0
    %1928 = vmatmul.mubr.f32.gmra.mrb[0].mxu0 %v1787
    %v1929 = vpop.f32.mrb[0].mxu0
    %v1930 = vadd.f32 0.0, %v1929
    %v1931 = vpop.f32.mrb[0].mxu0
    %v1932 = vadd.f32 0.0, %v1931
    %1933 = vmatprep.mubr.f32.mxu0 0.0
    %1934 = vmatmul.mubr.f32.gmra.mrb[0].mxu0 %v1788
    %v1935 = vpop.f32.mrb[0].mxu0
    %v1936 = vadd.f32 0.0, %v1935
    %v1937 = vpop.f32.mrb[0].mxu0
    %v1938 = vadd.f32 0.0, %v1937
    %1939 = vmatprep.mubr.f32.mxu0 0.0
    %1940 = vmatmul.mubr.f32.gmra.mrb[0].mxu0 %v1789
    %v1941 = vpop.f32.mrb[0].mxu0
    %v1942 = vadd.f32 0.0, %v1941
    %v1943 = vpop.f32.mrb[0].mxu0
    %v1944 = vadd.f32 0.0, %v1943
    %1945 = vmatprep.mubr.f32.mxu0 0.0
    %1946 = vmatmul.mubr.f32.gmra.mrb[0].mxu0 %v1790
    %v1947 = vpop.f32.mrb[0].mxu0
    %v1948 = vadd.f32 0.0, %v1947
    %v1949 = vpop.f32.mrb[0].mxu0
    %v1950 = vadd.f32 0.0, %v1949
    %1951 = vdwg.mxu0
    %1952 = vmatprep.subr.mxu0 %v232
    %1953 = vmatpush1.msra.mxu0 %v231
    %1954 = vmatprep.subr.mxu0 %v236
    %1955 = vmatpush1.msra.mxu0 %v235
    %1956 = vmatprep.subr.mxu0 %v240
    %1957 = vmatpush1.msra.mxu0 %v239
    %1958 = vmatprep.subr.mxu0 %v244
    %1959 = vmatpush1.msra.mxu0 %v243
    %1960 = vmatprep.subr.mxu0 %v248
    %1961 = vmatpush1.msra.mxu0 %v247
    %1962 = vmatprep.subr.mxu0 %v252
    %1963 = vmatpush1.msra.mxu0 %v251
    %1964 = vmatprep.subr.mxu0 %v256
    %1965 = vmatpush1.msra.mxu0 %v255
    %1966 = vmatprep.subr.mxu0 %v260
    %1967 = vmatpush1.msra.mxu0 %v259
    %1968 = vmatprep.subr.mxu0 %v264
    %1969 = vmatpush1.msra.mxu0 %v263
    %1970 = vmatprep.subr.mxu0 %v268
    %1971 = vmatpush1.msra.mxu0 %v267
    %1972 = vmatprep.subr.mxu0 %v272
    %1973 = vmatpush1.msra.mxu0 %v271
    %1974 = vmatprep.subr.mxu0 %v276
    %1975 = vmatpush1.msra.mxu0 %v275
    %1976 = vmatprep.subr.mxu0 %v280
    %1977 = vmatpush1.msra.mxu0 %v279
    %1978 = vmatprep.subr.mxu0 %v284
    %1979 = vmatpush1.msra.mxu0 %v283
    %1980 = vmatprep.subr.mxu0 %v288
    %1981 = vmatpush1.msra.mxu0 %v287
    %1982 = vmatprep.subr.mxu0 %v292
    %1983 = vmatpush1.msra.mxu0 %v291
    %1984 = vmatprep.subr.mxu0 0.0
    %1985 = vmatpush1.msra.mxu0 0.0
    %1986 = vmatprep.subr.mxu0 0.0
    %1987 = vmatpush1.msra.mxu0 0.0
    %1988 = vmatprep.subr.mxu0 0.0
    %1989 = vmatpush1.msra.mxu0 0.0
    %1990 = vmatprep.subr.mxu0 0.0
    %1991 = vmatpush1.msra.mxu0 0.0
    %1992 = vmatprep.subr.mxu0 0.0
    %1993 = vmatpush1.msra.mxu0 0.0
    %1994 = vmatprep.subr.mxu0 0.0
    %1995 = vmatpush1.msra.mxu0 0.0
    %1996 = vmatprep.subr.mxu0 0.0
    %1997 = vmatpush1.msra.mxu0 0.0
    %1998 = vmatprep.subr.mxu0 0.0
    %1999 = vmatpush1.msra.mxu0 0.0
    %2000 = vmatprep.subr.mxu0 0.0
    %2001 = vmatpush1.msra.mxu0 0.0
    %2002 = vmatprep.subr.mxu0 0.0
    %2003 = vmatpush1.msra.mxu0 0.0
    %2004 = vmatprep.subr.mxu0 0.0
    %2005 = vmatpush1.msra.mxu0 0.0
    %2006 = vmatprep.subr.mxu0 0.0
    %2007 = vmatpush1.msra.mxu0 0.0
    %2008 = vmatprep.subr.mxu0 0.0
    %2009 = vmatpush1.msra.mxu0 0.0
    %2010 = vmatprep.subr.mxu0 0.0
    %2011 = vmatpush1.msra.mxu0 0.0
    %2012 = vmatprep.subr.mxu0 0.0
    %2013 = vmatpush1.msra.mxu0 0.0
    %2014 = vmatprep.subr.mxu0 0.0
    %2015 = vmatpush1.msra.mxu0 0.0
    %2016 = vmatprep.mubr.f32.mxu0 0.0
    %2017 = vmatmul.mubr.f32.gmra.mrb[0].mxu0 %v1775
    %v2018 = vpop.f32.mrb[0].mxu0
    %v2019 = vadd.f32 0.0, %v2018
    %v2020 = vpop.f32.mrb[0].mxu0
    %v2021 = vadd.f32 0.0, %v2020
    %2022 = vmatprep.mubr.f32.mxu0 0.0
    %2023 = vmatmul.mubr.f32.gmra.mrb[0].mxu0 %v1776
    %v2024 = vpop.f32.mrb[0].mxu0
    %v2025 = vadd.f32 0.0, %v2024
    %v2026 = vpop.f32.mrb[0].mxu0
    %v2027 = vadd.f32 0.0, %v2026
    %2028 = vmatprep.mubr.f32.mxu0 0.0
    %2029 = vmatmul.mubr.f32.gmra.mrb[0].mxu0 %v1777
    %v2030 = vpop.f32.mrb[0].mxu0
    %v2031 = vadd.f32 0.0, %v2030
    %v2032 = vpop.f32.mrb[0].mxu0
    %v2033 = vadd.f32 0.0, %v2032
    %2034 = vmatprep.mubr.f32.mxu0 0.0
    %2035 = vmatmul.mubr.f32.gmra.mrb[0].mxu0 %v1778
    %v2036 = vpop.f32.mrb[0].mxu0
    %v2037 = vadd.f32 0.0, %v2036
    %v2038 = vpop.f32.mrb[0].mxu0
    %v2039 = vadd.f32 0.0, %v2038
    %2040 = vmatprep.mubr.f32.mxu0 0.0
    %2041 = vmatmul.mubr.f32.gmra.mrb[0].mxu0 %v1779
    %v2042 = vpop.f32.mrb[0].mxu0
    %v2043 = vadd.f32 0.0, %v2042
    %v2044 = vpop.f32.mrb[0].mxu0
    %v2045 = vadd.f32 0.0, %v2044
    %2046 = vmatprep.mubr.f32.mxu0 0.0
    %2047 = vmatmul.mubr.f32.gmra.mrb[0].mxu0 %v1780
    %v2048 = vpop.f32.mrb[0].mxu0
    %v2049 = vadd.f32 0.0, %v2048
    %v2050 = vpop.f32.mrb[0].mxu0
    %v2051 = vadd.f32 0.0, %v2050
    %2052 = vmatprep.mubr.f32.mxu0 0.0
    %2053 = vmatmul.mubr.f32.gmra.mrb[0].mxu0 %v1781
    %v2054 = vpop.f32.mrb[0].mxu0
    %v2055 = vadd.f32 0.0, %v2054
    %v2056 = vpop.f32.mrb[0].mxu0
    %v2057 = vadd.f32 0.0, %v2056
    %2058 = vmatprep.mubr.f32.mxu0 0.0
    %2059 = vmatmul.mubr.f32.gmra.mrb[0].mxu0 %v1782
    %v2060 = vpop.f32.mrb[0].mxu0
    %v2061 = vadd.f32 0.0, %v2060
    %v2062 = vpop.f32.mrb[0].mxu0
    %v2063 = vadd.f32 0.0, %v2062
    %2064 = vmatprep.mubr.f32.mxu0 0.0
    %2065 = vmatmul.mubr.f32.gmra.mrb[0].mxu0 %v1783
    %v2066 = vpop.f32.mrb[0].mxu0
    %v2067 = vadd.f32 0.0, %v2066
    %v2068 = vpop.f32.mrb[0].mxu0
    %v2069 = vadd.f32 0.0, %v2068
    %2070 = vmatprep.mubr.f32.mxu0 0.0
    %2071 = vmatmul.mubr.f32.gmra.mrb[0].mxu0 %v1784
    %v2072 = vpop.f32.mrb[0].mxu0
    %v2073 = vadd.f32 0.0, %v2072
    %v2074 = vpop.f32.mrb[0].mxu0
    %v2075 = vadd.f32 0.0, %v2074
    %2076 = vmatprep.mubr.f32.mxu0 0.0
    %2077 = vmatmul.mubr.f32.gmra.mrb[0].mxu0 %v1785
    %v2078 = vpop.f32.mrb[0].mxu0
    %v2079 = vadd.f32 0.0, %v2078
    %v2080 = vpop.f32.mrb[0].mxu0
    %v2081 = vadd.f32 0.0, %v2080
    %2082 = vmatprep.mubr.f32.mxu0 0.0
    %2083 = vmatmul.mubr.f32.gmra.mrb[0].mxu0 %v1786
    %v2084 = vpop.f32.mrb[0].mxu0
    %v2085 = vadd.f32 0.0, %v2084
    %v2086 = vpop.f32.mrb[0].mxu0
    %v2087 = vadd.f32 0.0, %v2086
    %2088 = vmatprep.mubr.f32.mxu0 0.0
    %2089 = vmatmul.mubr.f32.gmra.mrb[0].mxu0 %v1787
    %v2090 = vpop.f32.mrb[0].mxu0
    %v2091 = vadd.f32 0.0, %v2090
    %v2092 = vpop.f32.mrb[0].mxu0
    %v2093 = vadd.f32 0.0, %v2092
    %2094 = vmatprep.mubr.f32.mxu0 0.0
    %2095 = vmatmul.mubr.f32.gmra.mrb[0].mxu0 %v1788
    %v2096 = vpop.f32.mrb[0].mxu0
    %v2097 = vadd.f32 0.0, %v2096
    %v2098 = vpop.f32.mrb[0].mxu0
    %v2099 = vadd.f32 0.0, %v2098
    %2100 = vmatprep.mubr.f32.mxu0 0.0
    %2101 = vmatmul.mubr.f32.gmra.mrb[0].mxu0 %v1789
    %v2102 = vpop.f32.mrb[0].mxu0
    %v2103 = vadd.f32 0.0, %v2102
    %v2104 = vpop.f32.mrb[0].mxu0
    %v2105 = vadd.f32 0.0, %v2104
    %2106 = vmatprep.mubr.f32.mxu0 0.0
    %2107 = vmatmul.mubr.f32.gmra.mrb[0].mxu0 %v1790
    %v2108 = vpop.f32.mrb[0].mxu0
    %v2109 = vadd.f32 0.0, %v2108
    %v2110 = vpop.f32.mrb[0].mxu0
    %v2111 = vadd.f32 0.0, %v2110
    %2112 = vdwg.mxu0
    %v2113 = vpack.c.bf16 %v1864, %v1858
    %v2114 = vpack.c.bf16 %v1876, %v1870
    %v2115 = vpack.c.bf16 %v1888, %v1882
    %v2116 = vpack.c.bf16 %v1900, %v1894
    %v2117 = vpack.c.bf16 %v1912, %v1906
    %v2118 = vpack.c.bf16 %v1924, %v1918
    %v2119 = vpack.c.bf16 %v1936, %v1930
    %v2120 = vpack.c.bf16 %v1948, %v1942
    %v2121 = vpack.c.bf16 %v1866, %v1860
    %v2122 = vpack.c.bf16 %v1878, %v1872
    %v2123 = vpack.c.bf16 %v1890, %v1884
    %v2124 = vpack.c.bf16 %v1902, %v1896
    %v2125 = vpack.c.bf16 %v1914, %v1908
    %v2126 = vpack.c.bf16 %v1926, %v1920
    %v2127 = vpack.c.bf16 %v1938, %v1932
    %v2128 = vpack.c.bf16 %v1950, %v1944
    %2129 = vmatprep.subr.bf16.mxu0 0
    %2130 = vmatpush1.bf16.msra.mxu0 %v2113
    %2131 = vmatprep.subr.bf16.mxu0 0
    %2132 = vmatpush1.bf16.msra.mxu0 %v2114
    %2133 = vmatprep.subr.bf16.mxu0 0
    %2134 = vmatpush1.bf16.msra.mxu0 %v2115
    %2135 = vmatprep.subr.bf16.mxu0 0
    %2136 = vmatpush1.bf16.msra.mxu0 %v2116
    %2137 = vmatprep.subr.bf16.mxu0 0
    %2138 = vmatpush1.bf16.msra.mxu0 %v2117
    %2139 = vmatprep.subr.bf16.mxu0 0
    %2140 = vmatpush1.bf16.msra.mxu0 %v2118
    %2141 = vmatprep.subr.bf16.mxu0 0
    %2142 = vmatpush1.bf16.msra.mxu0 %v2119
    %2143 = vmatprep.subr.bf16.mxu0 0
    %2144 = vmatpush1.bf16.msra.mxu0 %v2120
    %2145 = vmatprep.subr.bf16.mxu0 0
    %2146 = vmatpush1.bf16.msra.mxu0 %v2121
    %2147 = vmatprep.subr.bf16.mxu0 0
    %2148 = vmatpush1.bf16.msra.mxu0 %v2122
    %2149 = vmatprep.subr.bf16.mxu0 0
    %2150 = vmatpush1.bf16.msra.mxu0 %v2123
    %2151 = vmatprep.subr.bf16.mxu0 0
    %2152 = vmatpush1.bf16.msra.mxu0 %v2124
    %2153 = vmatprep.subr.bf16.mxu0 0
    %2154 = vmatpush1.bf16.msra.mxu0 %v2125
    %2155 = vmatprep.subr.bf16.mxu0 0
    %2156 = vmatpush1.bf16.msra.mxu0 %v2126
    %2157 = vmatprep.subr.bf16.mxu0 0
    %2158 = vmatpush1.bf16.msra.mxu0 %v2127
    %2159 = vmatprep.subr.bf16.mxu0 0
    %2160 = vmatpush1.bf16.msra.mxu0 %v2128
    %2161 = vmatprep.mubr.bf16.mxu0 %v924
    %2162 = vmatmul.mubr.bf16.gmra.mrb[0].mxu0 %v923
    %v2163 = vpop.f32.mrb[0].mxu0
    %v2164 = vadd.f32 0.0, %v2163
    %v2165 = vpop.f32.mrb[0].mxu0
    %v2166 = vpop.f32.mrb[0].mxu0
    %v2167 = vadd.f32 0.0, %v2166
    %v2168 = vpop.f32.mrb[0].mxu0
    %2169 = vmatprep.mubr.bf16.mxu0 %v926
    %2170 = vmatmul.mubr.bf16.gmra.mrb[0].mxu0 %v925
    %v2171 = vpop.f32.mrb[0].mxu0
    %v2172 = vadd.f32 0.0, %v2171
    %v2173 = vpop.f32.mrb[0].mxu0
    %v2174 = vpop.f32.mrb[0].mxu0
    %v2175 = vadd.f32 0.0, %v2174
    %v2176 = vpop.f32.mrb[0].mxu0
    %2177 = vmatprep.mubr.bf16.mxu0 %v928
    %2178 = vmatmul.mubr.bf16.gmra.mrb[0].mxu0 %v927
    %v2179 = vpop.f32.mrb[0].mxu0
    %v2180 = vadd.f32 0.0, %v2179
    %v2181 = vpop.f32.mrb[0].mxu0
    %v2182 = vpop.f32.mrb[0].mxu0
    %v2183 = vadd.f32 0.0, %v2182
    %v2184 = vpop.f32.mrb[0].mxu0
    %2185 = vmatprep.mubr.bf16.mxu0 %v930
    %2186 = vmatmul.mubr.bf16.gmra.mrb[0].mxu0 %v929
    %v2187 = vpop.f32.mrb[0].mxu0
    %v2188 = vadd.f32 0.0, %v2187
    %v2189 = vpop.f32.mrb[0].mxu0
    %v2190 = vpop.f32.mrb[0].mxu0
    %v2191 = vadd.f32 0.0, %v2190
    %v2192 = vpop.f32.mrb[0].mxu0
    %2193 = vmatprep.mubr.bf16.mxu0 %v932
    %2194 = vmatmul.mubr.bf16.gmra.mrb[0].mxu0 %v931
    %v2195 = vpop.f32.mrb[0].mxu0
    %v2196 = vadd.f32 0.0, %v2195
    %v2197 = vpop.f32.mrb[0].mxu0
    %v2198 = vpop.f32.mrb[0].mxu0
    %v2199 = vadd.f32 0.0, %v2198
    %v2200 = vpop.f32.mrb[0].mxu0
    %2201 = vmatprep.mubr.bf16.mxu0 %v934
    %2202 = vmatmul.mubr.bf16.gmra.mrb[0].mxu0 %v933
    %v2203 = vpop.f32.mrb[0].mxu0
    %v2204 = vadd.f32 0.0, %v2203
    %v2205 = vpop.f32.mrb[0].mxu0
    %v2206 = vpop.f32.mrb[0].mxu0
    %v2207 = vadd.f32 0.0, %v2206
    %v2208 = vpop.f32.mrb[0].mxu0
    %2209 = vmatprep.mubr.bf16.mxu0 %v936
    %2210 = vmatmul.mubr.bf16.gmra.mrb[0].mxu0 %v935
    %v2211 = vpop.f32.mrb[0].mxu0
    %v2212 = vadd.f32 0.0, %v2211
    %v2213 = vpop.f32.mrb[0].mxu0
    %v2214 = vpop.f32.mrb[0].mxu0
    %v2215 = vadd.f32 0.0, %v2214
    %v2216 = vpop.f32.mrb[0].mxu0
    %2217 = vmatprep.mubr.bf16.mxu0 %v938
    %2218 = vmatmul.mubr.bf16.gmra.mrb[0].mxu0 %v937
    %v2219 = vpop.f32.mrb[0].mxu0
    %v2220 = vadd.f32 0.0, %v2219
    %v2221 = vpop.f32.mrb[0].mxu0
    %v2222 = vpop.f32.mrb[0].mxu0
    %v2223 = vadd.f32 0.0, %v2222
    %v2224 = vpop.f32.mrb[0].mxu0
    %2225 = vdwg.mxu0
    %v2226 = vmul.f32 %v312, %v2019
    %v2227 = vmul.f32 %v317, %v2025
    %v2228 = vmul.f32 %v322, %v2031
    %v2229 = vmul.f32 %v327, %v2037
    %v2230 = vmul.f32 %v332, %v2043
    %v2231 = vmul.f32 %v337, %v2049
    %v2232 = vmul.f32 %v342, %v2055
    %v2233 = vmul.f32 %v347, %v2061
    %v2234 = vmul.f32 %v352, %v2067
    %v2235 = vmul.f32 %v357, %v2073
    %v2236 = vmul.f32 %v362, %v2079
    %v2237 = vmul.f32 %v367, %v2085
    %v2238 = vmul.f32 %v372, %v2091
    %v2239 = vmul.f32 %v377, %v2097
    %v2240 = vmul.f32 %v382, %v2103
    %v2241 = vmul.f32 %v387, %v2109
    %v2242 = vsub.f32 %v2164, %v2226
    %v2243 = vsub.f32 %v2167, %v2227
    %v2244 = vsub.f32 %v2172, %v2228
    %v2245 = vsub.f32 %v2175, %v2229
    %v2246 = vsub.f32 %v2180, %v2230
    %v2247 = vsub.f32 %v2183, %v2231
    %v2248 = vsub.f32 %v2188, %v2232
    %v2249 = vsub.f32 %v2191, %v2233
    %v2250 = vsub.f32 %v2196, %v2234
    %v2251 = vsub.f32 %v2199, %v2235
    %v2252 = vsub.f32 %v2204, %v2236
    %v2253 = vsub.f32 %v2207, %v2237
    %v2254 = vsub.f32 %v2212, %v2238
    %v2255 = vsub.f32 %v2215, %v2239
    %v2256 = vsub.f32 %v2220, %v2240
    %v2257 = vsub.f32 %v2223, %v2241
    %v2258 = vmul.f32 %v408, %v2021
    %v2259 = vmul.f32 %v413, %v2027
    %v2260 = vmul.f32 %v418, %v2033
    %v2261 = vmul.f32 %v423, %v2039
    %v2262 = vmul.f32 %v428, %v2045
    %v2263 = vmul.f32 %v433, %v2051
    %v2264 = vmul.f32 %v438, %v2057
    %v2265 = vmul.f32 %v443, %v2063
    %v2266 = vmul.f32 %v448, %v2069
    %v2267 = vmul.f32 %v453, %v2075
    %v2268 = vmul.f32 %v458, %v2081
    %v2269 = vmul.f32 %v463, %v2087
    %v2270 = vmul.f32 %v468, %v2093
    %v2271 = vmul.f32 %v473, %v2099
    %v2272 = vmul.f32 %v478, %v2105
    %v2273 = vmul.f32 %v483, %v2111
    %v2274 = vsub.f32 %v2242, %v2258
    %v2275 = vsub.f32 %v2243, %v2259
    %v2276 = vsub.f32 %v2244, %v2260
    %v2277 = vsub.f32 %v2245, %v2261
    %v2278 = vsub.f32 %v2246, %v2262
    %v2279 = vsub.f32 %v2247, %v2263
    %v2280 = vsub.f32 %v2248, %v2264
    %v2281 = vsub.f32 %v2249, %v2265
    %v2282 = vsub.f32 %v2250, %v2266
    %v2283 = vsub.f32 %v2251, %v2267
    %v2284 = vsub.f32 %v2252, %v2268
    %v2285 = vsub.f32 %v2253, %v2269
    %v2286 = vsub.f32 %v2254, %v2270
    %v2287 = vsub.f32 %v2255, %v2271
    %v2288 = vsub.f32 %v2256, %v2272
    %v2289 = vsub.f32 %v2257, %v2273
    %v2290 = vadd.f32 %v2274, %v213
    %v2291 = vadd.f32 %v2275, %v214
    %v2292 = vadd.f32 %v2276, %v215
    %v2293 = vadd.f32 %v2277, %v216
    %v2294 = vadd.f32 %v2278, %v217
    %v2295 = vadd.f32 %v2279, %v218
    %v2296 = vadd.f32 %v2280, %v219
    %v2297 = vadd.f32 %v2281, %v220
    %v2298 = vadd.f32 %v2282, %v221
    %v2299 = vadd.f32 %v2283, %v222
    %v2300 = vadd.f32 %v2284, %v223
    %v2301 = vadd.f32 %v2285, %v224
    %v2302 = vadd.f32 %v2286, %v225
    %v2303 = vadd.f32 %v2287, %v226
    %v2304 = vadd.f32 %v2288, %v227
    %v2305 = vadd.f32 %v2289, %v228
    %v2306 = vmul.f32 %v408, %v1775
    %v2307 = vmul.f32 %v413, %v1776
    %v2308 = vmul.f32 %v418, %v1777
    %v2309 = vmul.f32 %v423, %v1778
    %v2310 = vmul.f32 %v428, %v1779
    %v2311 = vmul.f32 %v433, %v1780
    %v2312 = vmul.f32 %v438, %v1781
    %v2313 = vmul.f32 %v443, %v1782
    %v2314 = vmul.f32 %v448, %v1783
    %v2315 = vmul.f32 %v453, %v1784
    %v2316 = vmul.f32 %v458, %v1785
    %v2317 = vmul.f32 %v463, %v1786
    %v2318 = vmul.f32 %v468, %v1787
    %v2319 = vmul.f32 %v473, %v1788
    %v2320 = vmul.f32 %v478, %v1789
    %v2321 = vmul.f32 %v483, %v1790
    %v2322 = vadd.f32 %v2290, %v2306
    %v2323 = vadd.f32 %v2291, %v2307
    %v2324 = vadd.f32 %v2292, %v2308
    %v2325 = vadd.f32 %v2293, %v2309
    %v2326 = vadd.f32 %v2294, %v2310
    %v2327 = vadd.f32 %v2295, %v2311
    %v2328 = vadd.f32 %v2296, %v2312
    %v2329 = vadd.f32 %v2297, %v2313
    %v2330 = vadd.f32 %v2298, %v2314
    %v2331 = vadd.f32 %v2299, %v2315
    %v2332 = vadd.f32 %v2300, %v2316
    %v2333 = vadd.f32 %v2301, %v2317
    %v2334 = vadd.f32 %v2302, %v2318
    %v2335 = vadd.f32 %v2303, %v2319
    %v2336 = vadd.f32 %v2304, %v2320
    %v2337 = vadd.f32 %v2305, %v2321
    %v2338 = vmul.f32 %v1775, 0.6
    %v2339 = vmul.f32 %v1776, 0.6
    %v2340 = vmul.f32 %v1777, 0.6
    %v2341 = vmul.f32 %v1778, 0.6
    %v2342 = vmul.f32 %v1779, 0.6
    %v2343 = vmul.f32 %v1780, 0.6
    %v2344 = vmul.f32 %v1781, 0.6
    %v2345 = vmul.f32 %v1782, 0.6
    %v2346 = vmul.f32 %v1783, 0.6
    %v2347 = vmul.f32 %v1784, 0.6
    %v2348 = vmul.f32 %v1785, 0.6
    %v2349 = vmul.f32 %v1786, 0.6
    %v2350 = vmul.f32 %v1787, 0.6
    %v2351 = vmul.f32 %v1788, 0.6
    %v2352 = vmul.f32 %v1789, 0.6
    %v2353 = vmul.f32 %v1790, 0.6
    %v2354 = vmul.f32 %v504, %v2322
    %v2355 = vmul.f32 %v509, %v2323
    %v2356 = vmul.f32 %v514, %v2324
    %v2357 = vmul.f32 %v519, %v2325
    %v2358 = vmul.f32 %v524, %v2326
    %v2359 = vmul.f32 %v529, %v2327
    %v2360 = vmul.f32 %v534, %v2328
    %v2361 = vmul.f32 %v539, %v2329
    %v2362 = vmul.f32 %v544, %v2330
    %v2363 = vmul.f32 %v549, %v2331
    %v2364 = vmul.f32 %v554, %v2332
    %v2365 = vmul.f32 %v559, %v2333
    %v2366 = vmul.f32 %v564, %v2334
    %v2367 = vmul.f32 %v569, %v2335
    %v2368 = vmul.f32 %v574, %v2336
    %v2369 = vmul.f32 %v579, %v2337
    %v2370 = vadd.f32 %v2338, %v2354
    %v2371 = vadd.f32 %v2339, %v2355
    %v2372 = vadd.f32 %v2340, %v2356
    %v2373 = vadd.f32 %v2341, %v2357
    %v2374 = vadd.f32 %v2342, %v2358
    %v2375 = vadd.f32 %v2343, %v2359
    %v2376 = vadd.f32 %v2344, %v2360
    %v2377 = vadd.f32 %v2345, %v2361
    %v2378 = vadd.f32 %v2346, %v2362
    %v2379 = vadd.f32 %v2347, %v2363
    %v2380 = vadd.f32 %v2348, %v2364
    %v2381 = vadd.f32 %v2349, %v2365
    %v2382 = vadd.f32 %v2350, %v2366
    %v2383 = vadd.f32 %v2351, %v2367
    %v2384 = vadd.f32 %v2352, %v2368
    %v2385 = vadd.f32 %v2353, %v2369
    %2386 = vst [vmem:[#allocation7] sm:$0xff] %v2370
    %2387 = vst [vmem:[#allocation7 + $0x8] sm:$0xff] %v2371
    %2388 = vst [vmem:[#allocation7 + $0x10] sm:$0xff] %v2372
    %2389 = vst [vmem:[#allocation7 + $0x18] sm:$0xff] %v2373
    %2390 = vst [vmem:[#allocation7 + $0x20] sm:$0xff] %v2374
    %2391 = vst [vmem:[#allocation7 + $0x28] sm:$0xff] %v2375
    %2392 = vst [vmem:[#allocation7 + $0x30] sm:$0xff] %v2376
    %2393 = vst [vmem:[#allocation7 + $0x38] sm:$0xff] %v2377
    %2394 = vst [vmem:[#allocation7 + $0x40] sm:$0xff] %v2378
    %2395 = vst [vmem:[#allocation7 + $0x48] sm:$0xff] %v2379
    %2396 = vst [vmem:[#allocation7 + $0x50] sm:$0xff] %v2380
    %2397 = vst [vmem:[#allocation7 + $0x58] sm:$0xff] %v2381
    %2398 = vst [vmem:[#allocation7 + $0x60] sm:$0xff] %v2382
    %2399 = vst [vmem:[#allocation7 + $0x68] sm:$0xff] %v2383
    %2400 = vst [vmem:[#allocation7 + $0x70] sm:$0xff] %v2384
    %2401 = vst [vmem:[#allocation7 + $0x78] sm:$0xff] %v2385
    // Predicated region
    $region63: #{tpu_custom_call.1} parent=1 // pred_check
      _
    $region64: #{tpu_custom_call.1} parent=1 // pred_check_branch
      %2403 = sbr.rel (0) target = $region66
    $region65: #{tpu_custom_call.1} parent=1 // pred_region
      %s2405 = ssub.s32 2048, 2048
      %2406 = vsyncadd [#allocation6], %s2405
      %s2407 = sshll.u32 [#allocation7], 4
      %s2408 = int_to_ptr.vmem [resolvable:$true] %s2407
      %2413 = dma.vmem_to_hbm [thread:$0]  %s2408, 2048, %s6, [#allocation6], 128, 128, 8
    $region66: #{tpu_custom_call.1} parent=1 // pred_fallthru
      _
    // Predicated region
    $region67: #{tpu_custom_call.1} parent=1 // pred_check
      _
    $region68: #{tpu_custom_call.1} parent=1 // pred_check_branch
      %2415 = sbr.rel (0) target = $region70
    $region69: #{tpu_custom_call.1} parent=1 // pred_region
      %2416 = dma.done [#allocation6], 2048
    $region70: #{tpu_custom_call.1} parent=1 // pred_fallthru
      _
    %2417 = vsyncpa [#allocation5], 1
    %2418 = vsyncpa [#allocation6], 1
  %2419 = vsyncmov [#allocation3]
  %s2420 = vpop.sfrf %2419
  %p2421 = scmp.eq.s32.totalorder %s2420, 0
  %p2422 = pneg %p2421
  %2424 = shalt.err (%p2422)

</llo_original>
